<compile_context>
chip_gen: v7x
topology: tpu7x:2x2x1
jax: 0.10.0
libtpu: 0.0.40
codegen_flags: <defaults>
</compile_context>

<pallas_src>
import functools

import jax
import jax.numpy as jnp
from jax import lax
from jax.experimental import pallas as pl
from jax.experimental.pallas import tpu as pltpu


def _round_up(x, m):
    return (x + m - 1) // m * m


def _dequant_f32(wq, scale, zero, group_size):
    """Dequantize a (tn, K) int-code tile with (tn // group_size, K) scale/zero -> f32."""
    gpb, K = scale.shape
    s = jnp.broadcast_to(scale[:, None, :], (gpb, group_size, K)).reshape(
        gpb * group_size, K)
    z = jnp.broadcast_to(zero[:, None, :], (gpb, group_size, K)).reshape(
        gpb * group_size, K)
    # TODO(synk): audit in the Mosaic dump whether this broadcast+reshape lowers
    # to sublane relayout copies; a stride-0 sublane-broadcast read would avoid
    # them.  It is only paid once per cached weight strip in stage 1.
    return (wq.astype(jnp.float32) - z) * s


# Contract last axis of lhs with last axis of rhs: (tm, K) x (tn, K) -> (tm, tn).
_DN_LAST = (((1,), (1,)), ((), ()))


def _gate_up_kernel(x_ref, w1q_ref, s1_ref, z1_ref, w3q_ref, s3_ref, z3_ref,
                    o_ref, w1c_ref, w3c_ref, *, group_size):
    # Grid: (ffn block j, token block i).  Token axis is inner, so the
    # dequantized bf16 weight strips are built once per ffn block and reused.
    @pl.when(pl.program_id(1) == 0)
    def _():
        w1c_ref[...] = _dequant_f32(w1q_ref[...], s1_ref[...], z1_ref[...],
                                    group_size).astype(jnp.bfloat16)
        w3c_ref[...] = _dequant_f32(w3q_ref[...], s3_ref[...], z3_ref[...],
                                    group_size).astype(jnp.bfloat16)

    x = x_ref[...].astype(jnp.bfloat16)
    a1 = lax.dot_general(x, w1c_ref[...], _DN_LAST,
                         preferred_element_type=jnp.float32)
    a3 = lax.dot_general(x, w3c_ref[...], _DN_LAST,
                         preferred_element_type=jnp.float32)
    o_ref[...] = ((a1 * jax.nn.sigmoid(a1)) * a3).astype(o_ref.dtype)  # silu(w1x)*w3x


def _down_kernel(h_ref, w2q_ref, s2_ref, z2_ref, o_ref, acc_ref, *, group_size):
    # Grid: (token i, hidden block j, ffn reduction block k); k is last.
    k = pl.program_id(2)

    @pl.when(k == 0)
    def _():
        acc_ref[...] = jnp.zeros_like(acc_ref)

    w2 = _dequant_f32(w2q_ref[...], s2_ref[...], z2_ref[...],
                      group_size).astype(jnp.bfloat16)
    acc_ref[...] += lax.dot_general(h_ref[...], w2, _DN_LAST,
                                    preferred_element_type=jnp.float32)

    @pl.when(k == pl.num_programs(2) - 1)
    def _():
        o_ref[...] = acc_ref[...].astype(o_ref.dtype)


def mixtral_hqq_mlp(x, w1, w3, w2, *, group_size,
                    tm=256, tn_ffn=256, tn_hid=256, tk=2048,
                    vmem_limit_bytes=32 * 1024 * 1024):
    """x: (T, hidden) f32.  w{1,2,3} = (W_q int8 codes, scale f32, zero f32)."""
    w1q, s1, z1 = w1
    w3q, s3, z3 = w3
    w2q, s2, z2 = w2
    T, H = x.shape
    F = w1q.shape[0]

    # Clamp tiles to the problem size.  tn=256 matches the 256-wide MXU on
    # v6e/v7x (use tn=128 on v5e); tk bounds stage-2 per-step VMEM for v7x.
    tm = min(tm, _round_up(T, 8))
    tn_ffn = min(tn_ffn, F)
    tn_hid = min(tn_hid, H)
    tk = min(tk, F)

    assert F % tn_ffn == 0 and H % tn_hid == 0 and F % tk == 0, "shape/tile mismatch"
    assert tn_ffn % group_size == 0 and tn_hid % group_size == 0
    gpb_f = tn_ffn // group_size   # groups per ffn weight block
    gpb_h = tn_hid // group_size   # groups per hidden weight block

    # Pad the (ragged) token dimension; padded rows compute zeros, sliced off.
    T_pad = _round_up(T, tm)
    if T_pad != T:
        x = jnp.pad(x, ((0, T_pad - T), (0, 0)))

    n_i = T_pad // tm
    n_jf = F // tn_ffn
    n_jh = H // tn_hid
    n_k = F // tk

    # ---- Stage 1: fused gate (w1) + up (w3) projection with SiLU gating ----
    gate_up = pl.pallas_call(
        functools.partial(_gate_up_kernel, group_size=group_size),
        out_shape=jax.ShapeDtypeStruct((T_pad, F), jnp.bfloat16),
        grid=(n_jf, n_i),
        in_specs=[
            pl.BlockSpec((tm, H), lambda j, i: (i, 0)),
            pl.BlockSpec((tn_ffn, H), lambda j, i: (j, 0)),
            pl.BlockSpec((gpb_f, H), lambda j, i: (j, 0)),
            pl.BlockSpec((gpb_f, H), lambda j, i: (j, 0)),
            pl.BlockSpec((tn_ffn, H), lambda j, i: (j, 0)),
            pl.BlockSpec((gpb_f, H), lambda j, i: (j, 0)),
            pl.BlockSpec((gpb_f, H), lambda j, i: (j, 0)),
        ],
        out_specs=pl.BlockSpec((tm, tn_ffn), lambda j, i: (i, j)),
        scratch_shapes=[pltpu.VMEM((tn_ffn, H), jnp.bfloat16),   # cached bf16 W1 strip
                        pltpu.VMEM((tn_ffn, H), jnp.bfloat16)],  # cached bf16 W3 strip
        compiler_params=pltpu.CompilerParams(
            dimension_semantics=("parallel", "arbitrary"),
            vmem_limit_bytes=vmem_limit_bytes),
    )(x, w1q, s1, z1, w3q, s3, z3)

    # ---- Stage 2: down projection (w2), K-tiled over ffn with f32 accumulator ----
    out = pl.pallas_call(
        functools.partial(_down_kernel, group_size=group_size),
        out_shape=jax.ShapeDtypeStruct((T_pad, H), jnp.float32),
        grid=(n_i, n_jh, n_k),
        in_specs=[
            pl.BlockSpec((tm, tk), lambda i, j, k: (i, k)),
            pl.BlockSpec((tn_hid, tk), lambda i, j, k: (j, k)),
            pl.BlockSpec((gpb_h, tk), lambda i, j, k: (j, k)),
            pl.BlockSpec((gpb_h, tk), lambda i, j, k: (j, k)),
        ],
        out_specs=pl.BlockSpec((tm, tn_hid), lambda i, j, k: (i, j)),
        scratch_shapes=[pltpu.VMEM((tm, tn_hid), jnp.float32)],
        compiler_params=pltpu.CompilerParams(
            dimension_semantics=("parallel", "parallel", "arbitrary"),
            vmem_limit_bytes=vmem_limit_bytes),
    )(gate_up, w2q, s2, z2)

    return out[:T] if T_pad != T else out


if __name__ == "__main__":
    T, HIDDEN, FFN, GROUP_SIZE = 16, 256, 512, 32

    key = jax.random.PRNGKey(0)
    ks = jax.random.split(key, 4)
    x = jax.random.normal(ks[0], (T, HIDDEN), jnp.float32)

    def make_hqq_weight(k, out_f, in_f):
        k1, k2, k3 = jax.random.split(k, 3)
        wq = jax.random.randint(k1, (out_f, in_f), 0, 16, jnp.int8)  # 4-bit codes
        scale = jax.random.uniform(k2, (out_f // GROUP_SIZE, in_f),
                                   jnp.float32, 0.01, 0.05)
        zero = jax.random.uniform(k3, (out_f // GROUP_SIZE, in_f),
                                  jnp.float32, 6.0, 9.0)
        return wq, scale, zero

    w1 = make_hqq_weight(ks[1], FFN, HIDDEN)     # gate proj  (ffn, hidden)
    w3 = make_hqq_weight(ks[2], FFN, HIDDEN)     # up proj    (ffn, hidden)
    w2 = make_hqq_weight(ks[3], HIDDEN, FFN)     # down proj  (hidden, ffn)

    # tk=256 at this toy ffn size exercises the stage-2 K-tiled accumulator.
    out = mixtral_hqq_mlp(x, w1, w3, w2, group_size=GROUP_SIZE, tk=256)
    out = jax.block_until_ready(out)

    # Pure-JAX f32 reference for correctness.
    def deq_full(w):
        wq, s, z = w
        s_full = jnp.repeat(s, GROUP_SIZE, axis=0)
        z_full = jnp.repeat(z, GROUP_SIZE, axis=0)
        return (wq.astype(jnp.float32) - z_full) * s_full

    h_ref = jax.nn.silu(x @ deq_full(w1).T) * (x @ deq_full(w3).T)
    ref = h_ref @ deq_full(w2).T

    assert out.shape == (T, HIDDEN)
    # bf16 MXU inputs + bf16 intermediate => compare with a bf16-scale tolerance.
    rel_err = float(jnp.max(jnp.abs(out - ref)) / (jnp.max(jnp.abs(ref)) + 1e-6))
    assert rel_err < 3e-2, f"rel_err={rel_err}"

    print("KERNEL_OK")
</pallas_src>

<mosaic_0001>
module attributes {stable_mosaic.version = 11 : i64} {
  func.func @_gate_up_kernel(%arg0: i32, %arg1: i32, %arg2: memref<16x256xf32, #tpu.memory_space<vmem>>, %arg3: memref<256x256xi8, #tpu.memory_space<vmem>>, %arg4: memref<8x256xf32, #tpu.memory_space<vmem>>, %arg5: memref<8x256xf32, #tpu.memory_space<vmem>>, %arg6: memref<256x256xi8, #tpu.memory_space<vmem>>, %arg7: memref<8x256xf32, #tpu.memory_space<vmem>>, %arg8: memref<8x256xf32, #tpu.memory_space<vmem>>, %arg9: memref<16x256xbf16, #tpu.memory_space<vmem>>, %arg10: memref<256x256xbf16, #tpu.memory_space<vmem>>, %arg11: memref<256x256xbf16, #tpu.memory_space<vmem>>) attributes {dimension_semantics = [#tpu.dimension_semantics<parallel>, #tpu.dimension_semantics<arbitrary>], iteration_bounds = array<i64: 2, 1>, scalar_prefetch = 0 : i64, scratch_operands = 2 : i64, tpu.core_type = #tpu.core_type<tc>, window_params = [{transform_indices = @transform_0, window_bounds = array<i64: 16, 256>}, {transform_indices = @transform_1, window_bounds = array<i64: 256, 256>}, {transform_indices = @transform_2, window_bounds = array<i64: 8, 256>}, {transform_indices = @transform_3, window_bounds = array<i64: 8, 256>}, {transform_indices = @transform_4, window_bounds = array<i64: 256, 256>}, {transform_indices = @transform_5, window_bounds = array<i64: 8, 256>}, {transform_indices = @transform_6, window_bounds = array<i64: 8, 256>}, {transform_indices = @transform_7, window_bounds = array<i64: 16, 256>}]} {
    %c0_i32 = arith.constant 0 : i32
    %0 = arith.cmpi eq, %arg1, %c0_i32 : i32
    %1 = arith.extui %0 : i1 to i32
    %c0_i32_0 = arith.constant 0 : i32
    %2 = arith.cmpi ne, %1, %c0_i32_0 : i32
    scf.if %2 {
      %c0_10 = arith.constant 0 : index
      %c0_11 = arith.constant 0 : index
      %18 = vector.load %arg3[%c0_10, %c0_11] : memref<256x256xi8, #tpu.memory_space<vmem>>, vector<256x256xi8>
      %c0_12 = arith.constant 0 : index
      %c0_13 = arith.constant 0 : index
      %19 = vector.load %arg4[%c0_12, %c0_13] : memref<8x256xf32, #tpu.memory_space<vmem>>, vector<8x256xf32>
      %c0_14 = arith.constant 0 : index
      %c0_15 = arith.constant 0 : index
      %20 = vector.load %arg5[%c0_14, %c0_15] : memref<8x256xf32, #tpu.memory_space<vmem>>, vector<8x256xf32>
      %21 = vector.shape_cast %19 : vector<8x256xf32> to vector<8x1x256xf32>
      %22 = vector.shape_cast %21 : vector<8x1x256xf32> to vector<8x1x256xf32>
      %23 = vector.broadcast %22 : vector<8x1x256xf32> to vector<8x32x256xf32>
      %24 = vector.shape_cast %23 : vector<8x32x256xf32> to vector<256x256xf32>
      %25 = vector.shape_cast %20 : vector<8x256xf32> to vector<8x1x256xf32>
      %26 = vector.shape_cast %25 : vector<8x1x256xf32> to vector<8x1x256xf32>
      %27 = vector.broadcast %26 : vector<8x1x256xf32> to vector<8x32x256xf32>
      %28 = vector.shape_cast %27 : vector<8x32x256xf32> to vector<256x256xf32>
      %29 = arith.sitofp %18 : vector<256x256xi8> to vector<256x256xf32>
      %30 = arith.subf %29, %28 : vector<256x256xf32>
      %31 = arith.mulf %30, %24 : vector<256x256xf32>
      %32 = arith.truncf %31 : vector<256x256xf32> to vector<256x256xbf16>
      %c0_16 = arith.constant 0 : index
      %c0_17 = arith.constant 0 : index
      %33 = vector.load %arg10[%c0_16, %c0_17] : memref<256x256xbf16, #tpu.memory_space<vmem>>, vector<256x256xbf16>
      tpu.vector_store %arg10[%c0_16, %c0_17], %32 {strides = array<i32>} : memref<256x256xbf16, #tpu.memory_space<vmem>>, vector<256x256xbf16>,
      %c0_18 = arith.constant 0 : index
      %c0_19 = arith.constant 0 : index
      %34 = vector.load %arg6[%c0_18, %c0_19] : memref<256x256xi8, #tpu.memory_space<vmem>>, vector<256x256xi8>
      %c0_20 = arith.constant 0 : index
      %c0_21 = arith.constant 0 : index
      %35 = vector.load %arg7[%c0_20, %c0_21] : memref<8x256xf32, #tpu.memory_space<vmem>>, vector<8x256xf32>
      %c0_22 = arith.constant 0 : index
      %c0_23 = arith.constant 0 : index
      %36 = vector.load %arg8[%c0_22, %c0_23] : memref<8x256xf32, #tpu.memory_space<vmem>>, vector<8x256xf32>
      %37 = vector.shape_cast %35 : vector<8x256xf32> to vector<8x1x256xf32>
      %38 = vector.shape_cast %37 : vector<8x1x256xf32> to vector<8x1x256xf32>
      %39 = vector.broadcast %38 : vector<8x1x256xf32> to vector<8x32x256xf32>
      %40 = vector.shape_cast %39 : vector<8x32x256xf32> to vector<256x256xf32>
      %41 = vector.shape_cast %36 : vector<8x256xf32> to vector<8x1x256xf32>
      %42 = vector.shape_cast %41 : vector<8x1x256xf32> to vector<8x1x256xf32>
      %43 = vector.broadcast %42 : vector<8x1x256xf32> to vector<8x32x256xf32>
      %44 = vector.shape_cast %43 : vector<8x32x256xf32> to vector<256x256xf32>
      %45 = arith.sitofp %34 : vector<256x256xi8> to vector<256x256xf32>
      %46 = arith.subf %45, %44 : vector<256x256xf32>
      %47 = arith.mulf %46, %40 : vector<256x256xf32>
      %48 = arith.truncf %47 : vector<256x256xf32> to vector<256x256xbf16>
      %c0_24 = arith.constant 0 : index
      %c0_25 = arith.constant 0 : index
      %49 = vector.load %arg11[%c0_24, %c0_25] : memref<256x256xbf16, #tpu.memory_space<vmem>>, vector<256x256xbf16>
      tpu.vector_store %arg11[%c0_24, %c0_25], %48 {strides = array<i32>} : memref<256x256xbf16, #tpu.memory_space<vmem>>, vector<256x256xbf16>,
    } else {
    }
    %c0 = arith.constant 0 : index
    %c0_1 = arith.constant 0 : index
    %3 = vector.load %arg2[%c0, %c0_1] : memref<16x256xf32, #tpu.memory_space<vmem>>, vector<16x256xf32>
    %4 = arith.truncf %3 : vector<16x256xf32> to vector<16x256xbf16>
    %c0_2 = arith.constant 0 : index
    %c0_3 = arith.constant 0 : index
    %5 = vector.load %arg10[%c0_2, %c0_3] : memref<256x256xbf16, #tpu.memory_space<vmem>>, vector<256x256xbf16>
    %cst = arith.constant dense<0.000000e+00> : vector<16x256xf32>
    %6 = tpu.matmul %4, %5, %cst {dimension_numbers = #tpu.dot_dimension_numbers<[1], [1], [0], [0], [0, 0, 1, 0], [], []>} : vector<16x256xbf16>, vector<256x256xbf16>, vector<16x256xf32> -> vector<16x256xf32>
    %c0_4 = arith.constant 0 : index
    %c0_5 = arith.constant 0 : index
    %7 = vector.load %arg11[%c0_4, %c0_5] : memref<256x256xbf16, #tpu.memory_space<vmem>>, vector<256x256xbf16>
    %cst_6 = arith.constant dense<0.000000e+00> : vector<16x256xf32>
    %8 = tpu.matmul %4, %7, %cst_6 {dimension_numbers = #tpu.dot_dimension_numbers<[1], [1], [0], [0], [0, 0, 1, 0], [], []>} : vector<16x256xbf16>, vector<256x256xbf16>, vector<16x256xf32> -> vector<16x256xf32>
    %9 = arith.negf %6 : vector<16x256xf32>
    %10 = math.exp %9 : vector<16x256xf32>
    %cst_7 = arith.constant 1.000000e+00 : f32
    %11 = vector.broadcast %cst_7 : f32 to vector<16x256xf32>
    %12 = arith.addf %11, %10 : vector<16x256xf32>
    %13 = arith.divf %11, %12 : vector<16x256xf32>
    %14 = arith.mulf %6, %13 : vector<16x256xf32>
    %15 = arith.mulf %14, %8 : vector<16x256xf32>
    %16 = arith.truncf %15 : vector<16x256xf32> to vector<16x256xbf16>
    %c0_8 = arith.constant 0 : index
    %c0_9 = arith.constant 0 : index
    %17 = vector.load %arg9[%c0_8, %c0_9] : memref<16x256xbf16, #tpu.memory_space<vmem>>, vector<16x256xbf16>
    tpu.vector_store %arg9[%c0_8, %c0_9], %16 {strides = array<i32>} : memref<16x256xbf16, #tpu.memory_space<vmem>>, vector<16x256xbf16>,
    return
  }
  func.func @transform_0(%arg0: i32, %arg1: i32) -> (i32, i32) {
    %c0_i32 = arith.constant 0 : i32
    %c0_i32_0 = arith.constant 0 : i32
    return %arg1, %c0_i32 : i32, i32
  }
  func.func @transform_1(%arg0: i32, %arg1: i32) -> (i32, i32) {
    %c0_i32 = arith.constant 0 : i32
    %c0_i32_0 = arith.constant 0 : i32
    return %arg0, %c0_i32 : i32, i32
  }
  func.func @transform_2(%arg0: i32, %arg1: i32) -> (i32, i32) {
    %c0_i32 = arith.constant 0 : i32
    %c0_i32_0 = arith.constant 0 : i32
    return %arg0, %c0_i32 : i32, i32
  }
  func.func @transform_3(%arg0: i32, %arg1: i32) -> (i32, i32) {
    %c0_i32 = arith.constant 0 : i32
    %c0_i32_0 = arith.constant 0 : i32
    return %arg0, %c0_i32 : i32, i32
  }
  func.func @transform_4(%arg0: i32, %arg1: i32) -> (i32, i32) {
    %c0_i32 = arith.constant 0 : i32
    %c0_i32_0 = arith.constant 0 : i32
    return %arg0, %c0_i32 : i32, i32
  }
  func.func @transform_5(%arg0: i32, %arg1: i32) -> (i32, i32) {
    %c0_i32 = arith.constant 0 : i32
    %c0_i32_0 = arith.constant 0 : i32
    return %arg0, %c0_i32 : i32, i32
  }
  func.func @transform_6(%arg0: i32, %arg1: i32) -> (i32, i32) {
    %c0_i32 = arith.constant 0 : i32
    %c0_i32_0 = arith.constant 0 : i32
    return %arg0, %c0_i32 : i32, i32
  }
  func.func @transform_7(%arg0: i32, %arg1: i32) -> (i32, i32) {
    %c0_i32 = arith.constant 0 : i32
    return %arg1, %arg0 : i32, i32
  }
}

</mosaic_0001>

<llo_original>
// kernel: tpu_custom_call.1
$region0: #{tpu_custom_call.1}
  #allocation0 [shape = 'u32[]', space=smem, size = 0x4, offset = 0x4, fixed_abs, tag = 'smem constant byte address 0x4 - core index']
  #allocation1 [shape = 'u32[144,128]{1,0:T(1,128)}', space=vmem, size = 0x12000, scoped, tag = 'internal scratch']
  #allocation2 [shape = 'bf16[256,256]{1,0:T(16,128)(2,1)}', space=vmem, size = 0x20000, scoped, tag = 'scratch operand']
  #allocation3 [shape = 'bf16[256,256]{1,0:T(16,128)(2,1)}', space=vmem, size = 0x20000, scoped, tag = 'scratch operand']
  %s0 = inlined_call_operand.hbm [shape: f32[16,256], index: 0, kind: input, shape index: {}]
  %s1 = inlined_call_operand.hbm [shape: s8[512,256], index: 1, kind: input, shape index: {}]
  %s2 = inlined_call_operand.hbm [shape: f32[16,256], index: 2, kind: input, shape index: {}]
  %s3 = inlined_call_operand.hbm [shape: f32[16,256], index: 3, kind: input, shape index: {}]
  %s4 = inlined_call_operand.hbm [shape: s8[512,256], index: 4, kind: input, shape index: {}]
  %s5 = inlined_call_operand.hbm [shape: f32[16,256], index: 5, kind: input, shape index: {}]
  %s6 = inlined_call_operand.hbm [shape: f32[16,256], index: 6, kind: input, shape index: {}]
  %s7 = inlined_call_operand.hbm [shape: bf16[16,512], index: 7, kind: output, shape index: {}]
  %s8 = sld [smem:[#allocation0]]
  $region93: #{tpu_custom_call.1} parent=0
    _
  %s10 = ssub.s32 1, %s8
  %s11 = scalar_select 0, %s10, %s8
  $region1: #{tpu_custom_call.1} parent=0
    #allocation4 [shape = 'u8[16384]{0}', space=vmem, size = 0x4000, scoped, tag = 'input window, operand 0, single buffered']
    #allocation5 [shape = 's32[2]{0}', space=sflag, size = 0x8, scoped, tag = 'scoped memory for tpu_custom_call.1']
    #allocation6 [shape = 's32[2]{0}', space=sflag, size = 0x8, scoped, tag = 'scoped memory for tpu_custom_call.1']
    #allocation7 [shape = 'u8[131072]{0}', space=vmem, size = 0x20000, scoped, tag = 'input window, operand 1']
    #allocation8 [shape = 's32[2]{0}', space=sflag, size = 0x8, scoped, tag = 'scoped memory for tpu_custom_call.1']
    #allocation9 [shape = 'u8[16384]{0}', space=vmem, size = 0x4000, scoped, tag = 'input window, operand 2']
    #allocation10 [shape = 'u8[16384]{0}', space=vmem, size = 0x4000, scoped, tag = 'input window, operand 3']
    #allocation11 [shape = 's32[2]{0}', space=sflag, size = 0x8, scoped, tag = 'scoped memory for tpu_custom_call.1']
    #allocation12 [shape = 'u8[131072]{0}', space=vmem, size = 0x20000, scoped, tag = 'input window, operand 4']
    #allocation13 [shape = 'u8[16384]{0}', space=vmem, size = 0x4000, scoped, tag = 'input window, operand 5']
    #allocation14 [shape = 's32[2]{0}', space=sflag, size = 0x8, scoped, tag = 'scoped memory for tpu_custom_call.1']
    #allocation15 [shape = 'u8[16384]{0}', space=vmem, size = 0x4000, scoped, tag = 'input window, operand 6']
    #allocation16 [shape = 'u8[16384]{0}', space=vmem, size = 0x4000, scoped, tag = 'output window, operand 0']
    %12 = vsyncpa [#allocation5], 0
    %13 = vsyncpa [#allocation8], 0
    %s14 = scalar_lea.sflag [#allocation8], 1
    %15 = vsyncpa %s14, 0
    %16 = vsyncpa [#allocation11], 0
    %s17 = scalar_lea.sflag [#allocation11], 1
    %18 = vsyncpa %s17, 0
    %19 = vsyncpa [#allocation14], 0
    %s20 = scalar_lea.sflag [#allocation14], 1
    %21 = vsyncpa %s20, 0
    %22 = vsyncpa [#allocation6], 0
    %s23 = scalar_lea.sflag [#allocation6], 1
    %24 = vsyncpa %s23, 0
    loop: start=0, step=1, limit=4
    $region2: #{tpu_custom_call.1} parent=1 // loop_pre_header
      _
    $region3: #{tpu_custom_call.1} parent=1 // loop_header
      %s26 = sphi 0, %s30
      %p27 = scmp.ge.s32.totalorder %s26, 4
      %s33 = sphi 0, %s45
      %s34 = sphi 0, %s41
      %s35 = sphi 0, %s33
      %s36 = sphi 0, %s34
      %s37 = sphi 0, %s35
      %s38 = sphi 0, %s36
      %s48 = sphi 0, %s50
      %s51 = sphi 0, %s48
      %s52 = sphi 0, %s51
      %s68 = sphi 0, %s52
      %s74 = sphi 0, %s76
      %s77 = sphi 0, %s74
      %s78 = sphi 0, %s77
      %s94 = sphi 0, %s78
      %s100 = sphi 0, %s102
      %s103 = sphi 0, %s100
      %s104 = sphi 0, %s103
      %s120 = sphi 0, %s104
      %s126 = sphi 0, %s128
      %s129 = sphi 0, %s126
      %s130 = sphi 0, %s129
      %s146 = sphi 0, %s130
      %s152 = sphi 0, %s154
      %s155 = sphi 0, %s152
      %s156 = sphi 0, %s155
      %s172 = sphi 0, %s156
      %s178 = sphi 0, %s180
      %s181 = sphi 0, %s178
      %s182 = sphi 0, %s181
      %s198 = sphi 0, %s182
      %s204 = sphi 0, %s206
      %s207 = sphi 0, %s204
      %s208 = sphi 0, %s207
      %s224 = sphi 0, %s208
      %s232 = sphi 0, %s234
      %s235 = sphi 0, %s232
      %s236 = sphi 0, %s235
      %s252 = sphi 0, %s236
    $region4: #{tpu_custom_call.1} parent=1 // loop_header_branch
      %29 = sbr.rel (%p27) target = $region8
    $region5: #{tpu_custom_call.1} parent=1 // loop_body
      %s31 = ssub.s32 %s26, 1
      %s32 = ssub.s32 %s26, 2
      %s39 = sadd.s32 1, %s34
      %p40 = scmp.ge.s32.totalorder %s39, 1
      %s41 = scalar_select %p40, 0, %s39
      %s42 = sadd.s32 1, %s33
      %s43 = scalar_select %p40, %s42, %s33
      %p44 = scmp.ge.s32.totalorder %s43, 2
      %s45 = scalar_select %p44, 0, %s43
      %s46 = ssub.s32 %s34, %s41
      %p47 = scmp.eq.s32.totalorder %s46, 0
      %s49 = sadd.s32 %s48, 1
      %s50 = scalar_select %p47, %s48, %s49
      %p53 = pneg %p47
      %p54 = scmp.eq.s32.totalorder %s26, 1
      %p55 = por %p53, %p54
      %p56 = scmp.ne.s32.totalorder %s48, %s51
      %p57 = scmp.eq.s32.totalorder %s26, 0
      %p58 = por %p56, %p57
      %p59 = scmp.ne.s32.totalorder %s48, %s51
      %p60 = scmp.eq.s32.totalorder %s31, 1
      %p61 = por %p59, %p60
      %p62 = scmp.ne.s32.totalorder %s51, %s52
      %p63 = scmp.eq.s32.totalorder %s31, 0
      %p64 = por %p62, %p63
      %p65 = scmp.ne.s32.totalorder %s51, %s52
      %p66 = scmp.eq.s32.totalorder %s32, 1
      %p67 = por %p65, %p66
      %p69 = scmp.ne.s32.totalorder %s52, %s68
      %p70 = scmp.eq.s32.totalorder %s32, 0
      %p71 = por %p69, %p70
      %s72 = ssub.s32 %s33, %s45
      %p73 = scmp.eq.s32.totalorder %s72, 0
      %s75 = sadd.s32 %s74, 1
      %s76 = scalar_select %p73, %s74, %s75
      %p79 = pneg %p73
      %p80 = scmp.eq.s32.totalorder %s26, 1
      %p81 = por %p79, %p80
      %p82 = scmp.ne.s32.totalorder %s74, %s77
      %p83 = scmp.eq.s32.totalorder %s26, 0
      %p84 = por %p82, %p83
      %p85 = scmp.ne.s32.totalorder %s74, %s77
      %p86 = scmp.eq.s32.totalorder %s31, 1
      %p87 = por %p85, %p86
      %p88 = scmp.ne.s32.totalorder %s77, %s78
      %p89 = scmp.eq.s32.totalorder %s31, 0
      %p90 = por %p88, %p89
      %p91 = scmp.ne.s32.totalorder %s77, %s78
      %p92 = scmp.eq.s32.totalorder %s32, 1
      %p93 = por %p91, %p92
      %p95 = scmp.ne.s32.totalorder %s78, %s94
      %p96 = scmp.eq.s32.totalorder %s32, 0
      %p97 = por %p95, %p96
      %s98 = ssub.s32 %s33, %s45
      %p99 = scmp.eq.s32.totalorder %s98, 0
      %s101 = sadd.s32 %s100, 1
      %s102 = scalar_select %p99, %s100, %s101
      %p105 = pneg %p99
      %p106 = scmp.eq.s32.totalorder %s26, 1
      %p107 = por %p105, %p106
      %p108 = scmp.ne.s32.totalorder %s100, %s103
      %p109 = scmp.eq.s32.totalorder %s26, 0
      %p110 = por %p108, %p109
      %p111 = scmp.ne.s32.totalorder %s100, %s103
      %p112 = scmp.eq.s32.totalorder %s31, 1
      %p113 = por %p111, %p112
      %p114 = scmp.ne.s32.totalorder %s103, %s104
      %p115 = scmp.eq.s32.totalorder %s31, 0
      %p116 = por %p114, %p115
      %p117 = scmp.ne.s32.totalorder %s103, %s104
      %p118 = scmp.eq.s32.totalorder %s32, 1
      %p119 = por %p117, %p118
      %p121 = scmp.ne.s32.totalorder %s104, %s120
      %p122 = scmp.eq.s32.totalorder %s32, 0
      %p123 = por %p121, %p122
      %s124 = ssub.s32 %s33, %s45
      %p125 = scmp.eq.s32.totalorder %s124, 0
      %s127 = sadd.s32 %s126, 1
      %s128 = scalar_select %p125, %s126, %s127
      %p131 = pneg %p125
      %p132 = scmp.eq.s32.totalorder %s26, 1
      %p133 = por %p131, %p132
      %p134 = scmp.ne.s32.totalorder %s126, %s129
      %p135 = scmp.eq.s32.totalorder %s26, 0
      %p136 = por %p134, %p135
      %p137 = scmp.ne.s32.totalorder %s126, %s129
      %p138 = scmp.eq.s32.totalorder %s31, 1
      %p139 = por %p137, %p138
      %p140 = scmp.ne.s32.totalorder %s129, %s130
      %p141 = scmp.eq.s32.totalorder %s31, 0
      %p142 = por %p140, %p141
      %p143 = scmp.ne.s32.totalorder %s129, %s130
      %p144 = scmp.eq.s32.totalorder %s32, 1
      %p145 = por %p143, %p144
      %p147 = scmp.ne.s32.totalorder %s130, %s146
      %p148 = scmp.eq.s32.totalorder %s32, 0
      %p149 = por %p147, %p148
      %s150 = ssub.s32 %s33, %s45
      %p151 = scmp.eq.s32.totalorder %s150, 0
      %s153 = sadd.s32 %s152, 1
      %s154 = scalar_select %p151, %s152, %s153
      %p157 = pneg %p151
      %p158 = scmp.eq.s32.totalorder %s26, 1
      %p159 = por %p157, %p158
      %p160 = scmp.ne.s32.totalorder %s152, %s155
      %p161 = scmp.eq.s32.totalorder %s26, 0
      %p162 = por %p160, %p161
      %p163 = scmp.ne.s32.totalorder %s152, %s155
      %p164 = scmp.eq.s32.totalorder %s31, 1
      %p165 = por %p163, %p164
      %p166 = scmp.ne.s32.totalorder %s155, %s156
      %p167 = scmp.eq.s32.totalorder %s31, 0
      %p168 = por %p166, %p167
      %p169 = scmp.ne.s32.totalorder %s155, %s156
      %p170 = scmp.eq.s32.totalorder %s32, 1
      %p171 = por %p169, %p170
      %p173 = scmp.ne.s32.totalorder %s156, %s172
      %p174 = scmp.eq.s32.totalorder %s32, 0
      %p175 = por %p173, %p174
      %s176 = ssub.s32 %s33, %s45
      %p177 = scmp.eq.s32.totalorder %s176, 0
      %s179 = sadd.s32 %s178, 1
      %s180 = scalar_select %p177, %s178, %s179
      %p183 = pneg %p177
      %p184 = scmp.eq.s32.totalorder %s26, 1
      %p185 = por %p183, %p184
      %p186 = scmp.ne.s32.totalorder %s178, %s181
      %p187 = scmp.eq.s32.totalorder %s26, 0
      %p188 = por %p186, %p187
      %p189 = scmp.ne.s32.totalorder %s178, %s181
      %p190 = scmp.eq.s32.totalorder %s31, 1
      %p191 = por %p189, %p190
      %p192 = scmp.ne.s32.totalorder %s181, %s182
      %p193 = scmp.eq.s32.totalorder %s31, 0
      %p194 = por %p192, %p193
      %p195 = scmp.ne.s32.totalorder %s181, %s182
      %p196 = scmp.eq.s32.totalorder %s32, 1
      %p197 = por %p195, %p196
      %p199 = scmp.ne.s32.totalorder %s182, %s198
      %p200 = scmp.eq.s32.totalorder %s32, 0
      %p201 = por %p199, %p200
      %s202 = ssub.s32 %s33, %s45
      %p203 = scmp.eq.s32.totalorder %s202, 0
      %s205 = sadd.s32 %s204, 1
      %s206 = scalar_select %p203, %s204, %s205
      %p209 = pneg %p203
      %p210 = scmp.eq.s32.totalorder %s26, 1
      %p211 = por %p209, %p210
      %p212 = scmp.ne.s32.totalorder %s204, %s207
      %p213 = scmp.eq.s32.totalorder %s26, 0
      %p214 = por %p212, %p213
      %p215 = scmp.ne.s32.totalorder %s204, %s207
      %p216 = scmp.eq.s32.totalorder %s31, 1
      %p217 = por %p215, %p216
      %p218 = scmp.ne.s32.totalorder %s207, %s208
      %p219 = scmp.eq.s32.totalorder %s31, 0
      %p220 = por %p218, %p219
      %p221 = scmp.ne.s32.totalorder %s207, %s208
      %p222 = scmp.eq.s32.totalorder %s32, 1
      %p223 = por %p221, %p222
      %p225 = scmp.ne.s32.totalorder %s208, %s224
      %p226 = scmp.eq.s32.totalorder %s32, 0
      %p227 = por %p225, %p226
      %s228 = ssub.s32 %s34, %s41
      %s229 = ssub.s32 %s33, %s45
      %s230 = sor.u32 %s228, %s229
      %p231 = scmp.eq.s32.totalorder %s230, 0
      %s233 = sadd.s32 %s232, 1
      %s234 = scalar_select %p231, %s232, %s233
      %p237 = pneg %p231
      %p238 = scmp.eq.s32.totalorder %s26, 1
      %p239 = por %p237, %p238
      %p240 = scmp.ne.s32.totalorder %s232, %s235
      %p241 = scmp.eq.s32.totalorder %s26, 0
      %p242 = por %p240, %p241
      %p243 = scmp.ne.s32.totalorder %s232, %s235
      %p244 = scmp.eq.s32.totalorder %s31, 1
      %p245 = por %p243, %p244
      %p246 = scmp.ne.s32.totalorder %s235, %s236
      %p247 = scmp.eq.s32.totalorder %s31, 0
      %p248 = por %p246, %p247
      %p249 = scmp.ne.s32.totalorder %s235, %s236
      %p250 = scmp.eq.s32.totalorder %s32, 1
      %p251 = por %p249, %p250
      %p253 = scmp.ne.s32.totalorder %s236, %s252
      %p254 = scmp.eq.s32.totalorder %s32, 0
      %p255 = por %p253, %p254
      %p256 = scmp.le.s32.totalorder 1, %s26
      %p257 = scmp.lt.s32.totalorder %s26, 3
      %p258 = pnand %p256, %p257
      %p259 = pneg %p258
      // Predicated region
      $region9: #{tpu_custom_call.1} parent=5 // pred_check
        _
      $region10: #{tpu_custom_call.1} parent=5 // pred_check_branch
        %261 = sbr.rel (%p258) target = $region12
      $region11: #{tpu_custom_call.1} parent=5 // pred_region
        %s262 = ssub.s32 %s26, 1
        // Predicated region
        $region13: #{tpu_custom_call.1} parent=11 // pred_check
          %p263 = pneg %p64
        $region14: #{tpu_custom_call.1} parent=11 // pred_check_branch
          %265 = sbr.rel (%p263) target = $region16
        $region15: #{tpu_custom_call.1} parent=11 // pred_region
          %s266 = smul.u32 2, %s36
          %s268 = ssub.s32 512, 512
          %269 = vsyncadd [#allocation5], %s268
          %s270 = smul.addr %s266, 2
          %s271 = smul.addr %s270, 128
          %s272 = scalar_lea.hbm %s0, %s271
          %s273 = sshll.u32 [#allocation4], 4
          %s274 = int_to_ptr.vmem [resolvable:$true] %s273
          %279 = dma.hbm_to_vmem [thread:$0]  %s272, 512, %s274, [#allocation5], 256, 256, 16
        $region16: #{tpu_custom_call.1} parent=11 // pred_fallthru
          _
      $region12: #{tpu_custom_call.1} parent=5 // pred_fallthru
        _
      %p280 = scmp.lt.s32.totalorder %s26, 2
      // Predicated region
      $region17: #{tpu_custom_call.1} parent=5 // pred_check
        %p281 = pneg %p280
      $region18: #{tpu_custom_call.1} parent=5 // pred_check_branch
        %283 = sbr.rel (%p281) target = $region20
      $region19: #{tpu_custom_call.1} parent=5 // pred_region
        // Predicated region
        $region21: #{tpu_custom_call.1} parent=19 // pred_check
          %p284 = pneg %p84
        $region22: #{tpu_custom_call.1} parent=19 // pred_check_branch
          %286 = sbr.rel (%p284) target = $region24
        $region23: #{tpu_custom_call.1} parent=19 // pred_region
          %s287 = sand.u32 %s26, 1
          %s288 = scalar_lea.sflag [#allocation8], %s287
          %s289 = sand.u32 %s74, 1
          %s290 = smul.addr %s289, 128
          %s291 = scalar_lea.vmem [#allocation7], %s290
          %s292 = smul.u32 8, %s33
          %s294 = ssub.s32 2048, 2048
          %295 = vsyncadd %s288, %s294
          %s296 = smul.addr %s292, 2
          %s297 = smul.addr %s296, 128
          %s298 = scalar_lea.hbm %s1, %s297
          %s299 = sshll.u32 %s291, 4
          %s300 = int_to_ptr.vmem [resolvable:$true] %s299
          %305 = dma.hbm_to_vmem [thread:$0]  %s298, 2048, %s300, %s288, 256, 256, 16
        $region24: #{tpu_custom_call.1} parent=19 // pred_fallthru
          _
        // Predicated region
        $region25: #{tpu_custom_call.1} parent=19 // pred_check
          %p306 = pneg %p110
        $region26: #{tpu_custom_call.1} parent=19 // pred_check_branch
          %308 = sbr.rel (%p306) target = $region28
        $region27: #{tpu_custom_call.1} parent=19 // pred_region
          %s309 = sand.u32 %s26, 1
          %s310 = scalar_lea.sflag [#allocation8], %s309
          %s311 = sand.u32 %s100, 1
          %s312 = smul.addr %s311, 16
          %s313 = scalar_lea.vmem [#allocation9], %s312
          %s315 = ssub.s32 256, 256
          %316 = vsyncadd %s310, %s315
          %s317 = smul.addr %s33, 2
          %s318 = smul.addr %s317, 128
          %s319 = scalar_lea.hbm %s2, %s318
          %s321 = sshll.u32 %s313, 4
          %s322 = int_to_ptr.vmem [resolvable:$true] %s321
          %324 = dma.hbm_to_vmem [thread:$0]  %s319, 256, %s322, %s310
        $region28: #{tpu_custom_call.1} parent=19 // pred_fallthru
          _
        // Predicated region
        $region29: #{tpu_custom_call.1} parent=19 // pred_check
          %p325 = pneg %p136
        $region30: #{tpu_custom_call.1} parent=19 // pred_check_branch
          %327 = sbr.rel (%p325) target = $region32
        $region31: #{tpu_custom_call.1} parent=19 // pred_region
          %s328 = sand.u32 %s26, 1
          %s329 = scalar_lea.sflag [#allocation11], %s328
          %s330 = sand.u32 %s126, 1
          %s331 = smul.addr %s330, 16
          %s332 = scalar_lea.vmem [#allocation10], %s331
          %s334 = ssub.s32 256, 256
          %335 = vsyncadd %s329, %s334
          %s336 = smul.addr %s33, 2
          %s337 = smul.addr %s336, 128
          %s338 = scalar_lea.hbm %s3, %s337
          %s340 = sshll.u32 %s332, 4
          %s341 = int_to_ptr.vmem [resolvable:$true] %s340
          %343 = dma.hbm_to_vmem [thread:$0]  %s338, 256, %s341, %s329
        $region32: #{tpu_custom_call.1} parent=19 // pred_fallthru
          _
        // Predicated region
        $region33: #{tpu_custom_call.1} parent=19 // pred_check
          %p344 = pneg %p162
        $region34: #{tpu_custom_call.1} parent=19 // pred_check_branch
          %346 = sbr.rel (%p344) target = $region36
        $region35: #{tpu_custom_call.1} parent=19 // pred_region
          %s347 = sand.u32 %s26, 1
          %s348 = scalar_lea.sflag [#allocation11], %s347
          %s349 = sand.u32 %s152, 1
          %s350 = smul.addr %s349, 128
          %s351 = scalar_lea.vmem [#allocation12], %s350
          %s352 = smul.u32 8, %s33
          %s354 = ssub.s32 2048, 2048
          %355 = vsyncadd %s348, %s354
          %s356 = smul.addr %s352, 2
          %s357 = smul.addr %s356, 128
          %s358 = scalar_lea.hbm %s4, %s357
          %s359 = sshll.u32 %s351, 4
          %s360 = int_to_ptr.vmem [resolvable:$true] %s359
          %365 = dma.hbm_to_vmem [thread:$0]  %s358, 2048, %s360, %s348, 256, 256, 16
        $region36: #{tpu_custom_call.1} parent=19 // pred_fallthru
          _
        // Predicated region
        $region37: #{tpu_custom_call.1} parent=19 // pred_check
          %p366 = pneg %p188
        $region38: #{tpu_custom_call.1} parent=19 // pred_check_branch
          %368 = sbr.rel (%p366) target = $region40
        $region39: #{tpu_custom_call.1} parent=19 // pred_region
          %s369 = sand.u32 %s26, 1
          %s370 = scalar_lea.sflag [#allocation14], %s369
          %s371 = sand.u32 %s178, 1
          %s372 = smul.addr %s371, 16
          %s373 = scalar_lea.vmem [#allocation13], %s372
          %s375 = ssub.s32 256, 256
          %376 = vsyncadd %s370, %s375
          %s377 = smul.addr %s33, 2
          %s378 = smul.addr %s377, 128
          %s379 = scalar_lea.hbm %s5, %s378
          %s381 = sshll.u32 %s373, 4
          %s382 = int_to_ptr.vmem [resolvable:$true] %s381
          %384 = dma.hbm_to_vmem [thread:$0]  %s379, 256, %s382, %s370
        $region40: #{tpu_custom_call.1} parent=19 // pred_fallthru
          _
        // Predicated region
        $region41: #{tpu_custom_call.1} parent=19 // pred_check
          %p385 = pneg %p214
        $region42: #{tpu_custom_call.1} parent=19 // pred_check_branch
          %387 = sbr.rel (%p385) target = $region44
        $region43: #{tpu_custom_call.1} parent=19 // pred_region
          %s388 = sand.u32 %s26, 1
          %s389 = scalar_lea.sflag [#allocation14], %s388
          %s390 = sand.u32 %s204, 1
          %s391 = smul.addr %s390, 16
          %s392 = scalar_lea.vmem [#allocation15], %s391
          %s394 = ssub.s32 256, 256
          %395 = vsyncadd %s389, %s394
          %s396 = smul.addr %s33, 2
          %s397 = smul.addr %s396, 128
          %s398 = scalar_lea.hbm %s6, %s397
          %s400 = sshll.u32 %s392, 4
          %s401 = int_to_ptr.vmem [resolvable:$true] %s400
          %403 = dma.hbm_to_vmem [thread:$0]  %s398, 256, %s401, %s389
        $region44: #{tpu_custom_call.1} parent=19 // pred_fallthru
          _
      $region20: #{tpu_custom_call.1} parent=5 // pred_fallthru
        _
      %p404 = scmp.le.s32.totalorder 1, %s26
      %p405 = scmp.lt.s32.totalorder %s26, 3
      %p406 = pnand %p404, %p405
      %p407 = pneg %p406
      // Predicated region
      $region45: #{tpu_custom_call.1} parent=5 // pred_check
        _
      $region46: #{tpu_custom_call.1} parent=5 // pred_check_branch
        %409 = sbr.rel (%p406) target = $region48
      $region47: #{tpu_custom_call.1} parent=5 // pred_region
        %s410 = ssub.s32 %s26, 1
        // Predicated region
        $region49: #{tpu_custom_call.1} parent=47 // pred_check
          %p411 = pneg %p64
        $region50: #{tpu_custom_call.1} parent=47 // pred_check_branch
          %413 = sbr.rel (%p411) target = $region52
        $region51: #{tpu_custom_call.1} parent=47 // pred_region
          %414 = dma.done [#allocation5], 512
        $region52: #{tpu_custom_call.1} parent=47 // pred_fallthru
          _
        %s415 = sand.u32 %s31, 1
        %s416 = scalar_lea.sflag [#allocation8], %s415
        %s417 = sand.u32 %s77, 1
        %s418 = smul.addr %s417, 128
        %s419 = scalar_lea.vmem [#allocation7], %s418
        // Predicated region
        $region53: #{tpu_custom_call.1} parent=47 // pred_check
          %p420 = pneg %p90
        $region54: #{tpu_custom_call.1} parent=47 // pred_check_branch
          %422 = sbr.rel (%p420) target = $region56
        $region55: #{tpu_custom_call.1} parent=47 // pred_region
          %423 = dma.done %s416, 2048
        $region56: #{tpu_custom_call.1} parent=47 // pred_fallthru
          _
        %s424 = sand.u32 %s31, 1
        %s425 = scalar_lea.sflag [#allocation8], %s424
        %s426 = sand.u32 %s103, 1
        %s427 = smul.addr %s426, 16
        %s428 = scalar_lea.vmem [#allocation9], %s427
        // Predicated region
        $region57: #{tpu_custom_call.1} parent=47 // pred_check
          %p429 = pneg %p116
        $region58: #{tpu_custom_call.1} parent=47 // pred_check_branch
          %431 = sbr.rel (%p429) target = $region60
        $region59: #{tpu_custom_call.1} parent=47 // pred_region
          %432 = dma.done %s425, 256
        $region60: #{tpu_custom_call.1} parent=47 // pred_fallthru
          _
        %s433 = sand.u32 %s31, 1
        %s434 = scalar_lea.sflag [#allocation11], %s433
        %s435 = sand.u32 %s129, 1
        %s436 = smul.addr %s435, 16
        %s437 = scalar_lea.vmem [#allocation10], %s436
        // Predicated region
        $region61: #{tpu_custom_call.1} parent=47 // pred_check
          %p438 = pneg %p142
        $region62: #{tpu_custom_call.1} parent=47 // pred_check_branch
          %440 = sbr.rel (%p438) target = $region64
        $region63: #{tpu_custom_call.1} parent=47 // pred_region
          %441 = dma.done %s434, 256
        $region64: #{tpu_custom_call.1} parent=47 // pred_fallthru
          _
        %s442 = sand.u32 %s31, 1
        %s443 = scalar_lea.sflag [#allocation11], %s442
        %s444 = sand.u32 %s155, 1
        %s445 = smul.addr %s444, 128
        %s446 = scalar_lea.vmem [#allocation12], %s445
        // Predicated region
        $region65: #{tpu_custom_call.1} parent=47 // pred_check
          %p447 = pneg %p168
        $region66: #{tpu_custom_call.1} parent=47 // pred_check_branch
          %449 = sbr.rel (%p447) target = $region68
        $region67: #{tpu_custom_call.1} parent=47 // pred_region
          %450 = dma.done %s443, 2048
        $region68: #{tpu_custom_call.1} parent=47 // pred_fallthru
          _
        %s451 = sand.u32 %s31, 1
        %s452 = scalar_lea.sflag [#allocation14], %s451
        %s453 = sand.u32 %s181, 1
        %s454 = smul.addr %s453, 16
        %s455 = scalar_lea.vmem [#allocation13], %s454
        // Predicated region
        $region69: #{tpu_custom_call.1} parent=47 // pred_check
          %p456 = pneg %p194
        $region70: #{tpu_custom_call.1} parent=47 // pred_check_branch
          %458 = sbr.rel (%p456) target = $region72
        $region71: #{tpu_custom_call.1} parent=47 // pred_region
          %459 = dma.done %s452, 256
        $region72: #{tpu_custom_call.1} parent=47 // pred_fallthru
          _
        %s460 = sand.u32 %s31, 1
        %s461 = scalar_lea.sflag [#allocation14], %s460
        %s462 = sand.u32 %s207, 1
        %s463 = smul.addr %s462, 16
        %s464 = scalar_lea.vmem [#allocation15], %s463
        // Predicated region
        $region73: #{tpu_custom_call.1} parent=47 // pred_check
          %p465 = pneg %p220
        $region74: #{tpu_custom_call.1} parent=47 // pred_check_branch
          %467 = sbr.rel (%p465) target = $region76
        $region75: #{tpu_custom_call.1} parent=47 // pred_region
          %468 = dma.done %s461, 256
        $region76: #{tpu_custom_call.1} parent=47 // pred_fallthru
          _
        %p469 = pneg %p64
        %p470 = pneg %p61
        %s471 = sand.u32 %s31, 1
        %s472 = scalar_lea.sflag [#allocation8], %s471
        %s473 = sand.u32 %s77, 1
        %s474 = smul.addr %s473, 128
        %s475 = scalar_lea.vmem [#allocation7], %s474
        %p476 = pneg %p90
        %p477 = pneg %p87
        %s478 = sand.u32 %s31, 1
        %s479 = scalar_lea.sflag [#allocation8], %s478
        %s480 = sand.u32 %s103, 1
        %s481 = smul.addr %s480, 16
        %s482 = scalar_lea.vmem [#allocation9], %s481
        %p483 = pneg %p116
        %p484 = pneg %p113
        %s485 = sand.u32 %s31, 1
        %s486 = scalar_lea.sflag [#allocation11], %s485
        %s487 = sand.u32 %s129, 1
        %s488 = smul.addr %s487, 16
        %s489 = scalar_lea.vmem [#allocation10], %s488
        %p490 = pneg %p142
        %p491 = pneg %p139
        %s492 = sand.u32 %s31, 1
        %s493 = scalar_lea.sflag [#allocation11], %s492
        %s494 = sand.u32 %s155, 1
        %s495 = smul.addr %s494, 128
        %s496 = scalar_lea.vmem [#allocation12], %s495
        %p497 = pneg %p168
        %p498 = pneg %p165
        %s499 = sand.u32 %s31, 1
        %s500 = scalar_lea.sflag [#allocation14], %s499
        %s501 = sand.u32 %s181, 1
        %s502 = smul.addr %s501, 16
        %s503 = scalar_lea.vmem [#allocation13], %s502
        %p504 = pneg %p194
        %p505 = pneg %p191
        %s506 = sand.u32 %s31, 1
        %s507 = scalar_lea.sflag [#allocation14], %s506
        %s508 = sand.u32 %s207, 1
        %s509 = smul.addr %s508, 16
        %s510 = scalar_lea.vmem [#allocation15], %s509
        %p511 = pneg %p220
        %p512 = pneg %p217
        %p513 = pneg %p248
        %p514 = pneg %p245
        %s515 = sand.u32 %s235, 1
        %s516 = scalar_lea.sflag [#allocation6], %s515
        %s517 = sand.u32 %s235, 1
        %s518 = smul.addr %s517, 16
        %s519 = scalar_lea.vmem [#allocation16], %s518
        %s520 = smul.u32 2, %s36
        %s521 = smul.u32 8, %s35
        %s522 = smul.u32 8, %s35
        %s523 = smul.u32 2, %s36
        %s524 = smul.u32 2, %s35
        %p525 = scmp.eq.s32.totalorder %s36, 0
        // Predicated region
        $region77: #{tpu_custom_call.1} parent=47 // pred_check
          %p526 = pneg %p525
        $region78: #{tpu_custom_call.1} parent=47 // pred_check_branch
          %528 = sbr.rel (%p526) target = $region80
        $region79: #{tpu_custom_call.1} parent=47 // pred_region
          %v529 = vld [vmem:[%s419] sm:$0xff]
          %v530 = vld [vmem:[%s419 + $0x8] sm:$0xff]
          %v531 = vld [vmem:[%s419 + $0x10] sm:$0xff]
          %v532 = vld [vmem:[%s419 + $0x18] sm:$0xff]
          %v533 = vld [vmem:[%s419 + $0x20] sm:$0xff]
          %v534 = vld [vmem:[%s419 + $0x28] sm:$0xff]
          %v535 = vld [vmem:[%s419 + $0x30] sm:$0xff]
          %v536 = vld [vmem:[%s419 + $0x38] sm:$0xff]
          %v537 = vld [vmem:[%s419 + $0x40] sm:$0xff]
          %v538 = vld [vmem:[%s419 + $0x48] sm:$0xff]
          %v539 = vld [vmem:[%s419 + $0x50] sm:$0xff]
          %v540 = vld [vmem:[%s419 + $0x58] sm:$0xff]
          %v541 = vld [vmem:[%s419 + $0x60] sm:$0xff]
          %v542 = vld [vmem:[%s419 + $0x68] sm:$0xff]
          %v543 = vld [vmem:[%s419 + $0x70] sm:$0xff]
          %v544 = vld [vmem:[%s419 + $0x78] sm:$0xff]
          %v545 = vld [vmem:[%s428] sm:$0xff]
          %v546 = vld [vmem:[%s428 + $0x8] sm:$0xff]
          %v547 = vld [vmem:[%s437] sm:$0xff]
          %v548 = vld [vmem:[%s437 + $0x8] sm:$0xff]
          %v551 = vcombine.low %v545, %v546
          %v552 = vcombine.high %v545, %v546
          %v554 = vunpack.c.l.s4 1966171168
          %v555 = vunpack.c.0.s8 %v554
          %v556 = vlaneseq
          %v557 = vshrl.u32 %v556, 7
          %v558 = vsub.s32 %v555, %v557
          %v559 = vrot.slane %v551, %v558
          %v561 = vunpack.c.l.s4 1966171168
          %v562 = vunpack.c.0.s8 %v561
          %v563 = vlaneseq
          %v564 = vshrl.u32 %v563, 7
          %v565 = vsub.s32 %v562, %v564
          %v566 = vrot.slane %v552, %v565
          %v567 = vcombine.high %v559, %v559
          %v568 = vcombine.high %v566, %v566
          %v570 = vunpack.c.l.s4 1966171168
          %v571 = vunpack.c.0.s8 %v570
          %v572 = vlaneseq
          %v573 = vshrl.u32 %v572, 7
          %v574 = vsub.s32 %v571, %v573
          %v575 = vrot.slane %v559, %v574
          %v577 = vunpack.c.l.s4 1966171168
          %v578 = vunpack.c.0.s8 %v577
          %v579 = vlaneseq
          %v580 = vshrl.u32 %v579, 7
          %v581 = vsub.s32 %v578, %v580
          %v582 = vrot.slane %v566, %v581
          %v584 = vunpack.c.l.s4 1966171168
          %v585 = vunpack.c.0.s8 %v584
          %v586 = vlaneseq
          %v587 = vshrl.u32 %v586, 7
          %v588 = vsub.s32 %v585, %v587
          %v589 = vrot.slane %v567, %v588
          %v591 = vunpack.c.l.s4 1966171168
          %v592 = vunpack.c.0.s8 %v591
          %v593 = vlaneseq
          %v594 = vshrl.u32 %v593, 7
          %v595 = vsub.s32 %v592, %v594
          %v596 = vrot.slane %v568, %v595
          %v597 = vcombine.high %v575, %v575
          %v598 = vcombine.high %v582, %v582
          %v599 = vcombine.high %v589, %v589
          %v600 = vcombine.high %v596, %v596
          %v601 = vlaneseq
          %v602 = vshrl.u32 %v601, 7
          %v603 = vsub.s32 0, %v602
          %v604 = vrot.slane %v575, %v603
          %v605 = vlaneseq
          %v606 = vshrl.u32 %v605, 7
          %v607 = vsub.s32 1, %v606
          %v608 = vrot.slane %v575, %v607
          %v609 = vlaneseq
          %v610 = vshrl.u32 %v609, 7
          %v611 = vsub.s32 0, %v610
          %v612 = vrot.slane %v589, %v611
          %v613 = vlaneseq
          %v614 = vshrl.u32 %v613, 7
          %v615 = vsub.s32 1, %v614
          %v616 = vrot.slane %v589, %v615
          %v617 = vlaneseq
          %v618 = vshrl.u32 %v617, 7
          %v619 = vsub.s32 0, %v618
          %v620 = vrot.slane %v597, %v619
          %v621 = vlaneseq
          %v622 = vshrl.u32 %v621, 7
          %v623 = vsub.s32 1, %v622
          %v624 = vrot.slane %v597, %v623
          %v625 = vlaneseq
          %v626 = vshrl.u32 %v625, 7
          %v627 = vsub.s32 0, %v626
          %v628 = vrot.slane %v599, %v627
          %v629 = vlaneseq
          %v630 = vshrl.u32 %v629, 7
          %v631 = vsub.s32 1, %v630
          %v632 = vrot.slane %v599, %v631
          %v633 = vlaneseq
          %v634 = vshrl.u32 %v633, 7
          %v635 = vsub.s32 0, %v634
          %v636 = vrot.slane %v582, %v635
          %v637 = vlaneseq
          %v638 = vshrl.u32 %v637, 7
          %v639 = vsub.s32 1, %v638
          %v640 = vrot.slane %v582, %v639
          %v641 = vlaneseq
          %v642 = vshrl.u32 %v641, 7
          %v643 = vsub.s32 0, %v642
          %v644 = vrot.slane %v596, %v643
          %v645 = vlaneseq
          %v646 = vshrl.u32 %v645, 7
          %v647 = vsub.s32 1, %v646
          %v648 = vrot.slane %v596, %v647
          %v649 = vlaneseq
          %v650 = vshrl.u32 %v649, 7
          %v651 = vsub.s32 0, %v650
          %v652 = vrot.slane %v598, %v651
          %v653 = vlaneseq
          %v654 = vshrl.u32 %v653, 7
          %v655 = vsub.s32 1, %v654
          %v656 = vrot.slane %v598, %v655
          %v657 = vlaneseq
          %v658 = vshrl.u32 %v657, 7
          %v659 = vsub.s32 0, %v658
          %v660 = vrot.slane %v600, %v659
          %v661 = vlaneseq
          %v662 = vshrl.u32 %v661, 7
          %v663 = vsub.s32 1, %v662
          %v664 = vrot.slane %v600, %v663
          %v683 = vcombine.low %v547, %v548
          %v684 = vcombine.high %v547, %v548
          %v686 = vunpack.c.l.s4 1966171168
          %v687 = vunpack.c.0.s8 %v686
          %v688 = vlaneseq
          %v689 = vshrl.u32 %v688, 7
          %v690 = vsub.s32 %v687, %v689
          %v691 = vrot.slane %v683, %v690
          %v693 = vunpack.c.l.s4 1966171168
          %v694 = vunpack.c.0.s8 %v693
          %v695 = vlaneseq
          %v696 = vshrl.u32 %v695, 7
          %v697 = vsub.s32 %v694, %v696
          %v698 = vrot.slane %v684, %v697
          %v699 = vcombine.high %v691, %v691
          %v700 = vcombine.high %v698, %v698
          %v702 = vunpack.c.l.s4 1966171168
          %v703 = vunpack.c.0.s8 %v702
          %v704 = vlaneseq
          %v705 = vshrl.u32 %v704, 7
          %v706 = vsub.s32 %v703, %v705
          %v707 = vrot.slane %v691, %v706
          %v709 = vunpack.c.l.s4 1966171168
          %v710 = vunpack.c.0.s8 %v709
          %v711 = vlaneseq
          %v712 = vshrl.u32 %v711, 7
          %v713 = vsub.s32 %v710, %v712
          %v714 = vrot.slane %v698, %v713
          %v716 = vunpack.c.l.s4 1966171168
          %v717 = vunpack.c.0.s8 %v716
          %v718 = vlaneseq
          %v719 = vshrl.u32 %v718, 7
          %v720 = vsub.s32 %v717, %v719
          %v721 = vrot.slane %v699, %v720
          %v723 = vunpack.c.l.s4 1966171168
          %v724 = vunpack.c.0.s8 %v723
          %v725 = vlaneseq
          %v726 = vshrl.u32 %v725, 7
          %v727 = vsub.s32 %v724, %v726
          %v728 = vrot.slane %v700, %v727
          %v729 = vcombine.high %v707, %v707
          %v730 = vcombine.high %v714, %v714
          %v731 = vcombine.high %v721, %v721
          %v732 = vcombine.high %v728, %v728
          %v733 = vlaneseq
          %v734 = vshrl.u32 %v733, 7
          %v735 = vsub.s32 0, %v734
          %v736 = vrot.slane %v707, %v735
          %v737 = vlaneseq
          %v738 = vshrl.u32 %v737, 7
          %v739 = vsub.s32 1, %v738
          %v740 = vrot.slane %v707, %v739
          %v741 = vlaneseq
          %v742 = vshrl.u32 %v741, 7
          %v743 = vsub.s32 0, %v742
          %v744 = vrot.slane %v721, %v743
          %v745 = vlaneseq
          %v746 = vshrl.u32 %v745, 7
          %v747 = vsub.s32 1, %v746
          %v748 = vrot.slane %v721, %v747
          %v749 = vlaneseq
          %v750 = vshrl.u32 %v749, 7
          %v751 = vsub.s32 0, %v750
          %v752 = vrot.slane %v729, %v751
          %v753 = vlaneseq
          %v754 = vshrl.u32 %v753, 7
          %v755 = vsub.s32 1, %v754
          %v756 = vrot.slane %v729, %v755
          %v757 = vlaneseq
          %v758 = vshrl.u32 %v757, 7
          %v759 = vsub.s32 0, %v758
          %v760 = vrot.slane %v731, %v759
          %v761 = vlaneseq
          %v762 = vshrl.u32 %v761, 7
          %v763 = vsub.s32 1, %v762
          %v764 = vrot.slane %v731, %v763
          %v765 = vlaneseq
          %v766 = vshrl.u32 %v765, 7
          %v767 = vsub.s32 0, %v766
          %v768 = vrot.slane %v714, %v767
          %v769 = vlaneseq
          %v770 = vshrl.u32 %v769, 7
          %v771 = vsub.s32 1, %v770
          %v772 = vrot.slane %v714, %v771
          %v773 = vlaneseq
          %v774 = vshrl.u32 %v773, 7
          %v775 = vsub.s32 0, %v774
          %v776 = vrot.slane %v728, %v775
          %v777 = vlaneseq
          %v778 = vshrl.u32 %v777, 7
          %v779 = vsub.s32 1, %v778
          %v780 = vrot.slane %v728, %v779
          %v781 = vlaneseq
          %v782 = vshrl.u32 %v781, 7
          %v783 = vsub.s32 0, %v782
          %v784 = vrot.slane %v730, %v783
          %v785 = vlaneseq
          %v786 = vshrl.u32 %v785, 7
          %v787 = vsub.s32 1, %v786
          %v788 = vrot.slane %v730, %v787
          %v789 = vlaneseq
          %v790 = vshrl.u32 %v789, 7
          %v791 = vsub.s32 0, %v790
          %v792 = vrot.slane %v732, %v791
          %v793 = vlaneseq
          %v794 = vshrl.u32 %v793, 7
          %v795 = vsub.s32 1, %v794
          %v796 = vrot.slane %v732, %v795
          %v813 = vunpack.c.0.s8 %v529
          %v814 = vunpack.c.0.s8 %v530
          %v815 = vunpack.c.1.s8 %v529
          %v816 = vunpack.c.1.s8 %v530
          %v817 = vunpack.c.2.s8 %v529
          %v818 = vunpack.c.2.s8 %v530
          %v819 = vunpack.c.3.s8 %v529
          %v820 = vunpack.c.3.s8 %v530
          %v821 = vunpack.c.0.s8 %v531
          %v822 = vunpack.c.0.s8 %v532
          %v823 = vunpack.c.1.s8 %v531
          %v824 = vunpack.c.1.s8 %v532
          %v825 = vunpack.c.2.s8 %v531
          %v826 = vunpack.c.2.s8 %v532
          %v827 = vunpack.c.3.s8 %v531
          %v828 = vunpack.c.3.s8 %v532
          %v829 = vunpack.c.0.s8 %v533
          %v830 = vunpack.c.0.s8 %v534
          %v831 = vunpack.c.1.s8 %v533
          %v832 = vunpack.c.1.s8 %v534
          %v833 = vunpack.c.2.s8 %v533
          %v834 = vunpack.c.2.s8 %v534
          %v835 = vunpack.c.3.s8 %v533
          %v836 = vunpack.c.3.s8 %v534
          %v837 = vunpack.c.0.s8 %v535
          %v838 = vunpack.c.0.s8 %v536
          %v839 = vunpack.c.1.s8 %v535
          %v840 = vunpack.c.1.s8 %v536
          %v841 = vunpack.c.2.s8 %v535
          %v842 = vunpack.c.2.s8 %v536
          %v843 = vunpack.c.3.s8 %v535
          %v844 = vunpack.c.3.s8 %v536
          %v845 = vunpack.c.0.s8 %v537
          %v846 = vunpack.c.0.s8 %v538
          %v847 = vunpack.c.1.s8 %v537
          %v848 = vunpack.c.1.s8 %v538
          %v849 = vunpack.c.2.s8 %v537
          %v850 = vunpack.c.2.s8 %v538
          %v851 = vunpack.c.3.s8 %v537
          %v852 = vunpack.c.3.s8 %v538
          %v853 = vunpack.c.0.s8 %v539
          %v854 = vunpack.c.0.s8 %v540
          %v855 = vunpack.c.1.s8 %v539
          %v856 = vunpack.c.1.s8 %v540
          %v857 = vunpack.c.2.s8 %v539
          %v858 = vunpack.c.2.s8 %v540
          %v859 = vunpack.c.3.s8 %v539
          %v860 = vunpack.c.3.s8 %v540
          %v861 = vunpack.c.0.s8 %v541
          %v862 = vunpack.c.0.s8 %v542
          %v863 = vunpack.c.1.s8 %v541
          %v864 = vunpack.c.1.s8 %v542
          %v865 = vunpack.c.2.s8 %v541
          %v866 = vunpack.c.2.s8 %v542
          %v867 = vunpack.c.3.s8 %v541
          %v868 = vunpack.c.3.s8 %v542
          %v869 = vunpack.c.0.s8 %v543
          %v870 = vunpack.c.0.s8 %v544
          %v871 = vunpack.c.1.s8 %v543
          %v872 = vunpack.c.1.s8 %v544
          %v873 = vunpack.c.2.s8 %v543
          %v874 = vunpack.c.2.s8 %v544
          %v875 = vunpack.c.3.s8 %v543
          %v876 = vunpack.c.3.s8 %v544
          %v877 = vcvt.s32.f32 %v813
          %v878 = vcvt.s32.f32 %v814
          %v879 = vcvt.s32.f32 %v815
          %v880 = vcvt.s32.f32 %v816
          %v881 = vcvt.s32.f32 %v817
          %v882 = vcvt.s32.f32 %v818
          %v883 = vcvt.s32.f32 %v819
          %v884 = vcvt.s32.f32 %v820
          %v885 = vcvt.s32.f32 %v821
          %v886 = vcvt.s32.f32 %v822
          %v887 = vcvt.s32.f32 %v823
          %v888 = vcvt.s32.f32 %v824
          %v889 = vcvt.s32.f32 %v825
          %v890 = vcvt.s32.f32 %v826
          %v891 = vcvt.s32.f32 %v827
          %v892 = vcvt.s32.f32 %v828
          %v893 = vcvt.s32.f32 %v829
          %v894 = vcvt.s32.f32 %v830
          %v895 = vcvt.s32.f32 %v831
          %v896 = vcvt.s32.f32 %v832
          %v897 = vcvt.s32.f32 %v833
          %v898 = vcvt.s32.f32 %v834
          %v899 = vcvt.s32.f32 %v835
          %v900 = vcvt.s32.f32 %v836
          %v901 = vcvt.s32.f32 %v837
          %v902 = vcvt.s32.f32 %v838
          %v903 = vcvt.s32.f32 %v839
          %v904 = vcvt.s32.f32 %v840
          %v905 = vcvt.s32.f32 %v841
          %v906 = vcvt.s32.f32 %v842
          %v907 = vcvt.s32.f32 %v843
          %v908 = vcvt.s32.f32 %v844
          %v909 = vcvt.s32.f32 %v845
          %v910 = vcvt.s32.f32 %v846
          %v911 = vcvt.s32.f32 %v847
          %v912 = vcvt.s32.f32 %v848
          %v913 = vcvt.s32.f32 %v849
          %v914 = vcvt.s32.f32 %v850
          %v915 = vcvt.s32.f32 %v851
          %v916 = vcvt.s32.f32 %v852
          %v917 = vcvt.s32.f32 %v853
          %v918 = vcvt.s32.f32 %v854
          %v919 = vcvt.s32.f32 %v855
          %v920 = vcvt.s32.f32 %v856
          %v921 = vcvt.s32.f32 %v857
          %v922 = vcvt.s32.f32 %v858
          %v923 = vcvt.s32.f32 %v859
          %v924 = vcvt.s32.f32 %v860
          %v925 = vcvt.s32.f32 %v861
          %v926 = vcvt.s32.f32 %v862
          %v927 = vcvt.s32.f32 %v863
          %v928 = vcvt.s32.f32 %v864
          %v929 = vcvt.s32.f32 %v865
          %v930 = vcvt.s32.f32 %v866
          %v931 = vcvt.s32.f32 %v867
          %v932 = vcvt.s32.f32 %v868
          %v933 = vcvt.s32.f32 %v869
          %v934 = vcvt.s32.f32 %v870
          %v935 = vcvt.s32.f32 %v871
          %v936 = vcvt.s32.f32 %v872
          %v937 = vcvt.s32.f32 %v873
          %v938 = vcvt.s32.f32 %v874
          %v939 = vcvt.s32.f32 %v875
          %v940 = vcvt.s32.f32 %v876
          %v941 = vsub.f32 %v877, %v736
          %v942 = vsub.f32 %v878, %v740
          %v943 = vsub.f32 %v879, %v736
          %v944 = vsub.f32 %v880, %v740
          %v945 = vsub.f32 %v881, %v736
          %v946 = vsub.f32 %v882, %v740
          %v947 = vsub.f32 %v883, %v736
          %v948 = vsub.f32 %v884, %v740
          %v949 = vsub.f32 %v885, %v744
          %v950 = vsub.f32 %v886, %v748
          %v951 = vsub.f32 %v887, %v744
          %v952 = vsub.f32 %v888, %v748
          %v953 = vsub.f32 %v889, %v744
          %v954 = vsub.f32 %v890, %v748
          %v955 = vsub.f32 %v891, %v744
          %v956 = vsub.f32 %v892, %v748
          %v957 = vsub.f32 %v893, %v752
          %v958 = vsub.f32 %v894, %v756
          %v959 = vsub.f32 %v895, %v752
          %v960 = vsub.f32 %v896, %v756
          %v961 = vsub.f32 %v897, %v752
          %v962 = vsub.f32 %v898, %v756
          %v963 = vsub.f32 %v899, %v752
          %v964 = vsub.f32 %v900, %v756
          %v965 = vsub.f32 %v901, %v760
          %v966 = vsub.f32 %v902, %v764
          %v967 = vsub.f32 %v903, %v760
          %v968 = vsub.f32 %v904, %v764
          %v969 = vsub.f32 %v905, %v760
          %v970 = vsub.f32 %v906, %v764
          %v971 = vsub.f32 %v907, %v760
          %v972 = vsub.f32 %v908, %v764
          %v973 = vsub.f32 %v909, %v768
          %v974 = vsub.f32 %v910, %v772
          %v975 = vsub.f32 %v911, %v768
          %v976 = vsub.f32 %v912, %v772
          %v977 = vsub.f32 %v913, %v768
          %v978 = vsub.f32 %v914, %v772
          %v979 = vsub.f32 %v915, %v768
          %v980 = vsub.f32 %v916, %v772
          %v981 = vsub.f32 %v917, %v776
          %v982 = vsub.f32 %v918, %v780
          %v983 = vsub.f32 %v919, %v776
          %v984 = vsub.f32 %v920, %v780
          %v985 = vsub.f32 %v921, %v776
          %v986 = vsub.f32 %v922, %v780
          %v987 = vsub.f32 %v923, %v776
          %v988 = vsub.f32 %v924, %v780
          %v989 = vsub.f32 %v925, %v784
          %v990 = vsub.f32 %v926, %v788
          %v991 = vsub.f32 %v927, %v784
          %v992 = vsub.f32 %v928, %v788
          %v993 = vsub.f32 %v929, %v784
          %v994 = vsub.f32 %v930, %v788
          %v995 = vsub.f32 %v931, %v784
          %v996 = vsub.f32 %v932, %v788
          %v997 = vsub.f32 %v933, %v792
          %v998 = vsub.f32 %v934, %v796
          %v999 = vsub.f32 %v935, %v792
          %v1000 = vsub.f32 %v936, %v796
          %v1001 = vsub.f32 %v937, %v792
          %v1002 = vsub.f32 %v938, %v796
          %v1003 = vsub.f32 %v939, %v792
          %v1004 = vsub.f32 %v940, %v796
          %v1005 = vmul.f32 %v941, %v604
          %v1006 = vmul.f32 %v942, %v608
          %v1007 = vmul.f32 %v943, %v604
          %v1008 = vmul.f32 %v944, %v608
          %v1009 = vmul.f32 %v945, %v604
          %v1010 = vmul.f32 %v946, %v608
          %v1011 = vmul.f32 %v947, %v604
          %v1012 = vmul.f32 %v948, %v608
          %v1013 = vmul.f32 %v949, %v612
          %v1014 = vmul.f32 %v950, %v616
          %v1015 = vmul.f32 %v951, %v612
          %v1016 = vmul.f32 %v952, %v616
          %v1017 = vmul.f32 %v953, %v612
          %v1018 = vmul.f32 %v954, %v616
          %v1019 = vmul.f32 %v955, %v612
          %v1020 = vmul.f32 %v956, %v616
          %v1021 = vmul.f32 %v957, %v620
          %v1022 = vmul.f32 %v958, %v624
          %v1023 = vmul.f32 %v959, %v620
          %v1024 = vmul.f32 %v960, %v624
          %v1025 = vmul.f32 %v961, %v620
          %v1026 = vmul.f32 %v962, %v624
          %v1027 = vmul.f32 %v963, %v620
          %v1028 = vmul.f32 %v964, %v624
          %v1029 = vmul.f32 %v965, %v628
          %v1030 = vmul.f32 %v966, %v632
          %v1031 = vmul.f32 %v967, %v628
          %v1032 = vmul.f32 %v968, %v632
          %v1033 = vmul.f32 %v969, %v628
          %v1034 = vmul.f32 %v970, %v632
          %v1035 = vmul.f32 %v971, %v628
          %v1036 = vmul.f32 %v972, %v632
          %v1037 = vmul.f32 %v973, %v636
          %v1038 = vmul.f32 %v974, %v640
          %v1039 = vmul.f32 %v975, %v636
          %v1040 = vmul.f32 %v976, %v640
          %v1041 = vmul.f32 %v977, %v636
          %v1042 = vmul.f32 %v978, %v640
          %v1043 = vmul.f32 %v979, %v636
          %v1044 = vmul.f32 %v980, %v640
          %v1045 = vmul.f32 %v981, %v644
          %v1046 = vmul.f32 %v982, %v648
          %v1047 = vmul.f32 %v983, %v644
          %v1048 = vmul.f32 %v984, %v648
          %v1049 = vmul.f32 %v985, %v644
          %v1050 = vmul.f32 %v986, %v648
          %v1051 = vmul.f32 %v987, %v644
          %v1052 = vmul.f32 %v988, %v648
          %v1053 = vmul.f32 %v989, %v652
          %v1054 = vmul.f32 %v990, %v656
          %v1055 = vmul.f32 %v991, %v652
          %v1056 = vmul.f32 %v992, %v656
          %v1057 = vmul.f32 %v993, %v652
          %v1058 = vmul.f32 %v994, %v656
          %v1059 = vmul.f32 %v995, %v652
          %v1060 = vmul.f32 %v996, %v656
          %v1061 = vmul.f32 %v997, %v660
          %v1062 = vmul.f32 %v998, %v664
          %v1063 = vmul.f32 %v999, %v660
          %v1064 = vmul.f32 %v1000, %v664
          %v1065 = vmul.f32 %v1001, %v660
          %v1066 = vmul.f32 %v1002, %v664
          %v1067 = vmul.f32 %v1003, %v660
          %v1068 = vmul.f32 %v1004, %v664
          %v1069 = vpack.c.bf16 %v1007, %v1005
          %v1070 = vpack.c.bf16 %v1008, %v1006
          %v1071 = vpack.c.bf16 %v1011, %v1009
          %v1072 = vpack.c.bf16 %v1012, %v1010
          %v1073 = vpack.c.bf16 %v1015, %v1013
          %v1074 = vpack.c.bf16 %v1016, %v1014
          %v1075 = vpack.c.bf16 %v1019, %v1017
          %v1076 = vpack.c.bf16 %v1020, %v1018
          %v1077 = vpack.c.bf16 %v1023, %v1021
          %v1078 = vpack.c.bf16 %v1024, %v1022
          %v1079 = vpack.c.bf16 %v1027, %v1025
          %v1080 = vpack.c.bf16 %v1028, %v1026
          %v1081 = vpack.c.bf16 %v1031, %v1029
          %v1082 = vpack.c.bf16 %v1032, %v1030
          %v1083 = vpack.c.bf16 %v1035, %v1033
          %v1084 = vpack.c.bf16 %v1036, %v1034
          %v1085 = vpack.c.bf16 %v1039, %v1037
          %v1086 = vpack.c.bf16 %v1040, %v1038
          %v1087 = vpack.c.bf16 %v1043, %v1041
          %v1088 = vpack.c.bf16 %v1044, %v1042
          %v1089 = vpack.c.bf16 %v1047, %v1045
          %v1090 = vpack.c.bf16 %v1048, %v1046
          %v1091 = vpack.c.bf16 %v1051, %v1049
          %v1092 = vpack.c.bf16 %v1052, %v1050
          %v1093 = vpack.c.bf16 %v1055, %v1053
          %v1094 = vpack.c.bf16 %v1056, %v1054
          %v1095 = vpack.c.bf16 %v1059, %v1057
          %v1096 = vpack.c.bf16 %v1060, %v1058
          %v1097 = vpack.c.bf16 %v1063, %v1061
          %v1098 = vpack.c.bf16 %v1064, %v1062
          %v1099 = vpack.c.bf16 %v1067, %v1065
          %v1100 = vpack.c.bf16 %v1068, %v1066
          %1101 = vst [vmem:[#allocation2] sm:$0xff] %v1069
          %1102 = vst [vmem:[#allocation2 + $0x8] sm:$0xff] %v1070
          %1103 = vst [vmem:[#allocation2 + $0x10] sm:$0xff] %v1071
          %1104 = vst [vmem:[#allocation2 + $0x18] sm:$0xff] %v1072
          %1105 = vst [vmem:[#allocation2 + $0x20] sm:$0xff] %v1073
          %1106 = vst [vmem:[#allocation2 + $0x28] sm:$0xff] %v1074
          %1107 = vst [vmem:[#allocation2 + $0x30] sm:$0xff] %v1075
          %1108 = vst [vmem:[#allocation2 + $0x38] sm:$0xff] %v1076
          %1109 = vst [vmem:[#allocation2 + $0x40] sm:$0xff] %v1077
          %1110 = vst [vmem:[#allocation2 + $0x48] sm:$0xff] %v1078
          %1111 = vst [vmem:[#allocation2 + $0x50] sm:$0xff] %v1079
          %1112 = vst [vmem:[#allocation2 + $0x58] sm:$0xff] %v1080
          %1113 = vst [vmem:[#allocation2 + $0x60] sm:$0xff] %v1081
          %1114 = vst [vmem:[#allocation2 + $0x68] sm:$0xff] %v1082
          %1115 = vst [vmem:[#allocation2 + $0x70] sm:$0xff] %v1083
          %1116 = vst [vmem:[#allocation2 + $0x78] sm:$0xff] %v1084
          %1117 = vst [vmem:[#allocation2 + $0x80] sm:$0xff] %v1085
          %1118 = vst [vmem:[#allocation2 + $0x88] sm:$0xff] %v1086
          %1119 = vst [vmem:[#allocation2 + $0x90] sm:$0xff] %v1087
          %1120 = vst [vmem:[#allocation2 + $0x98] sm:$0xff] %v1088
          %1121 = vst [vmem:[#allocation2 + $0xa0] sm:$0xff] %v1089
          %1122 = vst [vmem:[#allocation2 + $0xa8] sm:$0xff] %v1090
          %1123 = vst [vmem:[#allocation2 + $0xb0] sm:$0xff] %v1091
          %1124 = vst [vmem:[#allocation2 + $0xb8] sm:$0xff] %v1092
          %1125 = vst [vmem:[#allocation2 + $0xc0] sm:$0xff] %v1093
          %1126 = vst [vmem:[#allocation2 + $0xc8] sm:$0xff] %v1094
          %1127 = vst [vmem:[#allocation2 + $0xd0] sm:$0xff] %v1095
          %1128 = vst [vmem:[#allocation2 + $0xd8] sm:$0xff] %v1096
          %1129 = vst [vmem:[#allocation2 + $0xe0] sm:$0xff] %v1097
          %1130 = vst [vmem:[#allocation2 + $0xe8] sm:$0xff] %v1098
          %1131 = vst [vmem:[#allocation2 + $0xf0] sm:$0xff] %v1099
          %1132 = vst [vmem:[#allocation2 + $0xf8] sm:$0xff] %v1100
          %v1133 = vld [vmem:[%s446] sm:$0xff]
          %v1134 = vld [vmem:[%s446 + $0x8] sm:$0xff]
          %v1135 = vld [vmem:[%s446 + $0x10] sm:$0xff]
          %v1136 = vld [vmem:[%s446 + $0x18] sm:$0xff]
          %v1137 = vld [vmem:[%s446 + $0x20] sm:$0xff]
          %v1138 = vld [vmem:[%s446 + $0x28] sm:$0xff]
          %v1139 = vld [vmem:[%s446 + $0x30] sm:$0xff]
          %v1140 = vld [vmem:[%s446 + $0x38] sm:$0xff]
          %v1141 = vld [vmem:[%s446 + $0x40] sm:$0xff]
          %v1142 = vld [vmem:[%s446 + $0x48] sm:$0xff]
          %v1143 = vld [vmem:[%s446 + $0x50] sm:$0xff]
          %v1144 = vld [vmem:[%s446 + $0x58] sm:$0xff]
          %v1145 = vld [vmem:[%s446 + $0x60] sm:$0xff]
          %v1146 = vld [vmem:[%s446 + $0x68] sm:$0xff]
          %v1147 = vld [vmem:[%s446 + $0x70] sm:$0xff]
          %v1148 = vld [vmem:[%s446 + $0x78] sm:$0xff]
          %v1149 = vld [vmem:[%s455] sm:$0xff]
          %v1150 = vld [vmem:[%s455 + $0x8] sm:$0xff]
          %v1151 = vld [vmem:[%s464] sm:$0xff]
          %v1152 = vld [vmem:[%s464 + $0x8] sm:$0xff]
          %v1155 = vcombine.low %v1149, %v1150
          %v1156 = vcombine.high %v1149, %v1150
          %v1158 = vunpack.c.l.s4 1966171168
          %v1159 = vunpack.c.0.s8 %v1158
          %v1160 = vlaneseq
          %v1161 = vshrl.u32 %v1160, 7
          %v1162 = vsub.s32 %v1159, %v1161
          %v1163 = vrot.slane %v1155, %v1162
          %v1165 = vunpack.c.l.s4 1966171168
          %v1166 = vunpack.c.0.s8 %v1165
          %v1167 = vlaneseq
          %v1168 = vshrl.u32 %v1167, 7
          %v1169 = vsub.s32 %v1166, %v1168
          %v1170 = vrot.slane %v1156, %v1169
          %v1171 = vcombine.high %v1163, %v1163
          %v1172 = vcombine.high %v1170, %v1170
          %v1174 = vunpack.c.l.s4 1966171168
          %v1175 = vunpack.c.0.s8 %v1174
          %v1176 = vlaneseq
          %v1177 = vshrl.u32 %v1176, 7
          %v1178 = vsub.s32 %v1175, %v1177
          %v1179 = vrot.slane %v1163, %v1178
          %v1181 = vunpack.c.l.s4 1966171168
          %v1182 = vunpack.c.0.s8 %v1181
          %v1183 = vlaneseq
          %v1184 = vshrl.u32 %v1183, 7
          %v1185 = vsub.s32 %v1182, %v1184
          %v1186 = vrot.slane %v1170, %v1185
          %v1188 = vunpack.c.l.s4 1966171168
          %v1189 = vunpack.c.0.s8 %v1188
          %v1190 = vlaneseq
          %v1191 = vshrl.u32 %v1190, 7
          %v1192 = vsub.s32 %v1189, %v1191
          %v1193 = vrot.slane %v1171, %v1192
          %v1195 = vunpack.c.l.s4 1966171168
          %v1196 = vunpack.c.0.s8 %v1195
          %v1197 = vlaneseq
          %v1198 = vshrl.u32 %v1197, 7
          %v1199 = vsub.s32 %v1196, %v1198
          %v1200 = vrot.slane %v1172, %v1199
          %v1201 = vcombine.high %v1179, %v1179
          %v1202 = vcombine.high %v1186, %v1186
          %v1203 = vcombine.high %v1193, %v1193
          %v1204 = vcombine.high %v1200, %v1200
          %v1205 = vlaneseq
          %v1206 = vshrl.u32 %v1205, 7
          %v1207 = vsub.s32 0, %v1206
          %v1208 = vrot.slane %v1179, %v1207
          %v1209 = vlaneseq
          %v1210 = vshrl.u32 %v1209, 7
          %v1211 = vsub.s32 1, %v1210
          %v1212 = vrot.slane %v1179, %v1211
          %v1213 = vlaneseq
          %v1214 = vshrl.u32 %v1213, 7
          %v1215 = vsub.s32 0, %v1214
          %v1216 = vrot.slane %v1193, %v1215
          %v1217 = vlaneseq
          %v1218 = vshrl.u32 %v1217, 7
          %v1219 = vsub.s32 1, %v1218
          %v1220 = vrot.slane %v1193, %v1219
          %v1221 = vlaneseq
          %v1222 = vshrl.u32 %v1221, 7
          %v1223 = vsub.s32 0, %v1222
          %v1224 = vrot.slane %v1201, %v1223
          %v1225 = vlaneseq
          %v1226 = vshrl.u32 %v1225, 7
          %v1227 = vsub.s32 1, %v1226
          %v1228 = vrot.slane %v1201, %v1227
          %v1229 = vlaneseq
          %v1230 = vshrl.u32 %v1229, 7
          %v1231 = vsub.s32 0, %v1230
          %v1232 = vrot.slane %v1203, %v1231
          %v1233 = vlaneseq
          %v1234 = vshrl.u32 %v1233, 7
          %v1235 = vsub.s32 1, %v1234
          %v1236 = vrot.slane %v1203, %v1235
          %v1237 = vlaneseq
          %v1238 = vshrl.u32 %v1237, 7
          %v1239 = vsub.s32 0, %v1238
          %v1240 = vrot.slane %v1186, %v1239
          %v1241 = vlaneseq
          %v1242 = vshrl.u32 %v1241, 7
          %v1243 = vsub.s32 1, %v1242
          %v1244 = vrot.slane %v1186, %v1243
          %v1245 = vlaneseq
          %v1246 = vshrl.u32 %v1245, 7
          %v1247 = vsub.s32 0, %v1246
          %v1248 = vrot.slane %v1200, %v1247
          %v1249 = vlaneseq
          %v1250 = vshrl.u32 %v1249, 7
          %v1251 = vsub.s32 1, %v1250
          %v1252 = vrot.slane %v1200, %v1251
          %v1253 = vlaneseq
          %v1254 = vshrl.u32 %v1253, 7
          %v1255 = vsub.s32 0, %v1254
          %v1256 = vrot.slane %v1202, %v1255
          %v1257 = vlaneseq
          %v1258 = vshrl.u32 %v1257, 7
          %v1259 = vsub.s32 1, %v1258
          %v1260 = vrot.slane %v1202, %v1259
          %v1261 = vlaneseq
          %v1262 = vshrl.u32 %v1261, 7
          %v1263 = vsub.s32 0, %v1262
          %v1264 = vrot.slane %v1204, %v1263
          %v1265 = vlaneseq
          %v1266 = vshrl.u32 %v1265, 7
          %v1267 = vsub.s32 1, %v1266
          %v1268 = vrot.slane %v1204, %v1267
          %v1287 = vcombine.low %v1151, %v1152
          %v1288 = vcombine.high %v1151, %v1152
          %v1290 = vunpack.c.l.s4 1966171168
          %v1291 = vunpack.c.0.s8 %v1290
          %v1292 = vlaneseq
          %v1293 = vshrl.u32 %v1292, 7
          %v1294 = vsub.s32 %v1291, %v1293
          %v1295 = vrot.slane %v1287, %v1294
          %v1297 = vunpack.c.l.s4 1966171168
          %v1298 = vunpack.c.0.s8 %v1297
          %v1299 = vlaneseq
          %v1300 = vshrl.u32 %v1299, 7
          %v1301 = vsub.s32 %v1298, %v1300
          %v1302 = vrot.slane %v1288, %v1301
          %v1303 = vcombine.high %v1295, %v1295
          %v1304 = vcombine.high %v1302, %v1302
          %v1306 = vunpack.c.l.s4 1966171168
          %v1307 = vunpack.c.0.s8 %v1306
          %v1308 = vlaneseq
          %v1309 = vshrl.u32 %v1308, 7
          %v1310 = vsub.s32 %v1307, %v1309
          %v1311 = vrot.slane %v1295, %v1310
          %v1313 = vunpack.c.l.s4 1966171168
          %v1314 = vunpack.c.0.s8 %v1313
          %v1315 = vlaneseq
          %v1316 = vshrl.u32 %v1315, 7
          %v1317 = vsub.s32 %v1314, %v1316
          %v1318 = vrot.slane %v1302, %v1317
          %v1320 = vunpack.c.l.s4 1966171168
          %v1321 = vunpack.c.0.s8 %v1320
          %v1322 = vlaneseq
          %v1323 = vshrl.u32 %v1322, 7
          %v1324 = vsub.s32 %v1321, %v1323
          %v1325 = vrot.slane %v1303, %v1324
          %v1327 = vunpack.c.l.s4 1966171168
          %v1328 = vunpack.c.0.s8 %v1327
          %v1329 = vlaneseq
          %v1330 = vshrl.u32 %v1329, 7
          %v1331 = vsub.s32 %v1328, %v1330
          %v1332 = vrot.slane %v1304, %v1331
          %v1333 = vcombine.high %v1311, %v1311
          %v1334 = vcombine.high %v1318, %v1318
          %v1335 = vcombine.high %v1325, %v1325
          %v1336 = vcombine.high %v1332, %v1332
          %v1337 = vlaneseq
          %v1338 = vshrl.u32 %v1337, 7
          %v1339 = vsub.s32 0, %v1338
          %v1340 = vrot.slane %v1311, %v1339
          %v1341 = vlaneseq
          %v1342 = vshrl.u32 %v1341, 7
          %v1343 = vsub.s32 1, %v1342
          %v1344 = vrot.slane %v1311, %v1343
          %v1345 = vlaneseq
          %v1346 = vshrl.u32 %v1345, 7
          %v1347 = vsub.s32 0, %v1346
          %v1348 = vrot.slane %v1325, %v1347
          %v1349 = vlaneseq
          %v1350 = vshrl.u32 %v1349, 7
          %v1351 = vsub.s32 1, %v1350
          %v1352 = vrot.slane %v1325, %v1351
          %v1353 = vlaneseq
          %v1354 = vshrl.u32 %v1353, 7
          %v1355 = vsub.s32 0, %v1354
          %v1356 = vrot.slane %v1333, %v1355
          %v1357 = vlaneseq
          %v1358 = vshrl.u32 %v1357, 7
          %v1359 = vsub.s32 1, %v1358
          %v1360 = vrot.slane %v1333, %v1359
          %v1361 = vlaneseq
          %v1362 = vshrl.u32 %v1361, 7
          %v1363 = vsub.s32 0, %v1362
          %v1364 = vrot.slane %v1335, %v1363
          %v1365 = vlaneseq
          %v1366 = vshrl.u32 %v1365, 7
          %v1367 = vsub.s32 1, %v1366
          %v1368 = vrot.slane %v1335, %v1367
          %v1369 = vlaneseq
          %v1370 = vshrl.u32 %v1369, 7
          %v1371 = vsub.s32 0, %v1370
          %v1372 = vrot.slane %v1318, %v1371
          %v1373 = vlaneseq
          %v1374 = vshrl.u32 %v1373, 7
          %v1375 = vsub.s32 1, %v1374
          %v1376 = vrot.slane %v1318, %v1375
          %v1377 = vlaneseq
          %v1378 = vshrl.u32 %v1377, 7
          %v1379 = vsub.s32 0, %v1378
          %v1380 = vrot.slane %v1332, %v1379
          %v1381 = vlaneseq
          %v1382 = vshrl.u32 %v1381, 7
          %v1383 = vsub.s32 1, %v1382
          %v1384 = vrot.slane %v1332, %v1383
          %v1385 = vlaneseq
          %v1386 = vshrl.u32 %v1385, 7
          %v1387 = vsub.s32 0, %v1386
          %v1388 = vrot.slane %v1334, %v1387
          %v1389 = vlaneseq
          %v1390 = vshrl.u32 %v1389, 7
          %v1391 = vsub.s32 1, %v1390
          %v1392 = vrot.slane %v1334, %v1391
          %v1393 = vlaneseq
          %v1394 = vshrl.u32 %v1393, 7
          %v1395 = vsub.s32 0, %v1394
          %v1396 = vrot.slane %v1336, %v1395
          %v1397 = vlaneseq
          %v1398 = vshrl.u32 %v1397, 7
          %v1399 = vsub.s32 1, %v1398
          %v1400 = vrot.slane %v1336, %v1399
          %v1417 = vunpack.c.0.s8 %v1133
          %v1418 = vunpack.c.0.s8 %v1134
          %v1419 = vunpack.c.1.s8 %v1133
          %v1420 = vunpack.c.1.s8 %v1134
          %v1421 = vunpack.c.2.s8 %v1133
          %v1422 = vunpack.c.2.s8 %v1134
          %v1423 = vunpack.c.3.s8 %v1133
          %v1424 = vunpack.c.3.s8 %v1134
          %v1425 = vunpack.c.0.s8 %v1135
          %v1426 = vunpack.c.0.s8 %v1136
          %v1427 = vunpack.c.1.s8 %v1135
          %v1428 = vunpack.c.1.s8 %v1136
          %v1429 = vunpack.c.2.s8 %v1135
          %v1430 = vunpack.c.2.s8 %v1136
          %v1431 = vunpack.c.3.s8 %v1135
          %v1432 = vunpack.c.3.s8 %v1136
          %v1433 = vunpack.c.0.s8 %v1137
          %v1434 = vunpack.c.0.s8 %v1138
          %v1435 = vunpack.c.1.s8 %v1137
          %v1436 = vunpack.c.1.s8 %v1138
          %v1437 = vunpack.c.2.s8 %v1137
          %v1438 = vunpack.c.2.s8 %v1138
          %v1439 = vunpack.c.3.s8 %v1137
          %v1440 = vunpack.c.3.s8 %v1138
          %v1441 = vunpack.c.0.s8 %v1139
          %v1442 = vunpack.c.0.s8 %v1140
          %v1443 = vunpack.c.1.s8 %v1139
          %v1444 = vunpack.c.1.s8 %v1140
          %v1445 = vunpack.c.2.s8 %v1139
          %v1446 = vunpack.c.2.s8 %v1140
          %v1447 = vunpack.c.3.s8 %v1139
          %v1448 = vunpack.c.3.s8 %v1140
          %v1449 = vunpack.c.0.s8 %v1141
          %v1450 = vunpack.c.0.s8 %v1142
          %v1451 = vunpack.c.1.s8 %v1141
          %v1452 = vunpack.c.1.s8 %v1142
          %v1453 = vunpack.c.2.s8 %v1141
          %v1454 = vunpack.c.2.s8 %v1142
          %v1455 = vunpack.c.3.s8 %v1141
          %v1456 = vunpack.c.3.s8 %v1142
          %v1457 = vunpack.c.0.s8 %v1143
          %v1458 = vunpack.c.0.s8 %v1144
          %v1459 = vunpack.c.1.s8 %v1143
          %v1460 = vunpack.c.1.s8 %v1144
          %v1461 = vunpack.c.2.s8 %v1143
          %v1462 = vunpack.c.2.s8 %v1144
          %v1463 = vunpack.c.3.s8 %v1143
          %v1464 = vunpack.c.3.s8 %v1144
          %v1465 = vunpack.c.0.s8 %v1145
          %v1466 = vunpack.c.0.s8 %v1146
          %v1467 = vunpack.c.1.s8 %v1145
          %v1468 = vunpack.c.1.s8 %v1146
          %v1469 = vunpack.c.2.s8 %v1145
          %v1470 = vunpack.c.2.s8 %v1146
          %v1471 = vunpack.c.3.s8 %v1145
          %v1472 = vunpack.c.3.s8 %v1146
          %v1473 = vunpack.c.0.s8 %v1147
          %v1474 = vunpack.c.0.s8 %v1148
          %v1475 = vunpack.c.1.s8 %v1147
          %v1476 = vunpack.c.1.s8 %v1148
          %v1477 = vunpack.c.2.s8 %v1147
          %v1478 = vunpack.c.2.s8 %v1148
          %v1479 = vunpack.c.3.s8 %v1147
          %v1480 = vunpack.c.3.s8 %v1148
          %v1481 = vcvt.s32.f32 %v1417
          %v1482 = vcvt.s32.f32 %v1418
          %v1483 = vcvt.s32.f32 %v1419
          %v1484 = vcvt.s32.f32 %v1420
          %v1485 = vcvt.s32.f32 %v1421
          %v1486 = vcvt.s32.f32 %v1422
          %v1487 = vcvt.s32.f32 %v1423
          %v1488 = vcvt.s32.f32 %v1424
          %v1489 = vcvt.s32.f32 %v1425
          %v1490 = vcvt.s32.f32 %v1426
          %v1491 = vcvt.s32.f32 %v1427
          %v1492 = vcvt.s32.f32 %v1428
          %v1493 = vcvt.s32.f32 %v1429
          %v1494 = vcvt.s32.f32 %v1430
          %v1495 = vcvt.s32.f32 %v1431
          %v1496 = vcvt.s32.f32 %v1432
          %v1497 = vcvt.s32.f32 %v1433
          %v1498 = vcvt.s32.f32 %v1434
          %v1499 = vcvt.s32.f32 %v1435
          %v1500 = vcvt.s32.f32 %v1436
          %v1501 = vcvt.s32.f32 %v1437
          %v1502 = vcvt.s32.f32 %v1438
          %v1503 = vcvt.s32.f32 %v1439
          %v1504 = vcvt.s32.f32 %v1440
          %v1505 = vcvt.s32.f32 %v1441
          %v1506 = vcvt.s32.f32 %v1442
          %v1507 = vcvt.s32.f32 %v1443
          %v1508 = vcvt.s32.f32 %v1444
          %v1509 = vcvt.s32.f32 %v1445
          %v1510 = vcvt.s32.f32 %v1446
          %v1511 = vcvt.s32.f32 %v1447
          %v1512 = vcvt.s32.f32 %v1448
          %v1513 = vcvt.s32.f32 %v1449
          %v1514 = vcvt.s32.f32 %v1450
          %v1515 = vcvt.s32.f32 %v1451
          %v1516 = vcvt.s32.f32 %v1452
          %v1517 = vcvt.s32.f32 %v1453
          %v1518 = vcvt.s32.f32 %v1454
          %v1519 = vcvt.s32.f32 %v1455
          %v1520 = vcvt.s32.f32 %v1456
          %v1521 = vcvt.s32.f32 %v1457
          %v1522 = vcvt.s32.f32 %v1458
          %v1523 = vcvt.s32.f32 %v1459
          %v1524 = vcvt.s32.f32 %v1460
          %v1525 = vcvt.s32.f32 %v1461
          %v1526 = vcvt.s32.f32 %v1462
          %v1527 = vcvt.s32.f32 %v1463
          %v1528 = vcvt.s32.f32 %v1464
          %v1529 = vcvt.s32.f32 %v1465
          %v1530 = vcvt.s32.f32 %v1466
          %v1531 = vcvt.s32.f32 %v1467
          %v1532 = vcvt.s32.f32 %v1468
          %v1533 = vcvt.s32.f32 %v1469
          %v1534 = vcvt.s32.f32 %v1470
          %v1535 = vcvt.s32.f32 %v1471
          %v1536 = vcvt.s32.f32 %v1472
          %v1537 = vcvt.s32.f32 %v1473
          %v1538 = vcvt.s32.f32 %v1474
          %v1539 = vcvt.s32.f32 %v1475
          %v1540 = vcvt.s32.f32 %v1476
          %v1541 = vcvt.s32.f32 %v1477
          %v1542 = vcvt.s32.f32 %v1478
          %v1543 = vcvt.s32.f32 %v1479
          %v1544 = vcvt.s32.f32 %v1480
          %v1545 = vsub.f32 %v1481, %v1340
          %v1546 = vsub.f32 %v1482, %v1344
          %v1547 = vsub.f32 %v1483, %v1340
          %v1548 = vsub.f32 %v1484, %v1344
          %v1549 = vsub.f32 %v1485, %v1340
          %v1550 = vsub.f32 %v1486, %v1344
          %v1551 = vsub.f32 %v1487, %v1340
          %v1552 = vsub.f32 %v1488, %v1344
          %v1553 = vsub.f32 %v1489, %v1348
          %v1554 = vsub.f32 %v1490, %v1352
          %v1555 = vsub.f32 %v1491, %v1348
          %v1556 = vsub.f32 %v1492, %v1352
          %v1557 = vsub.f32 %v1493, %v1348
          %v1558 = vsub.f32 %v1494, %v1352
          %v1559 = vsub.f32 %v1495, %v1348
          %v1560 = vsub.f32 %v1496, %v1352
          %v1561 = vsub.f32 %v1497, %v1356
          %v1562 = vsub.f32 %v1498, %v1360
          %v1563 = vsub.f32 %v1499, %v1356
          %v1564 = vsub.f32 %v1500, %v1360
          %v1565 = vsub.f32 %v1501, %v1356
          %v1566 = vsub.f32 %v1502, %v1360
          %v1567 = vsub.f32 %v1503, %v1356
          %v1568 = vsub.f32 %v1504, %v1360
          %v1569 = vsub.f32 %v1505, %v1364
          %v1570 = vsub.f32 %v1506, %v1368
          %v1571 = vsub.f32 %v1507, %v1364
          %v1572 = vsub.f32 %v1508, %v1368
          %v1573 = vsub.f32 %v1509, %v1364
          %v1574 = vsub.f32 %v1510, %v1368
          %v1575 = vsub.f32 %v1511, %v1364
          %v1576 = vsub.f32 %v1512, %v1368
          %v1577 = vsub.f32 %v1513, %v1372
          %v1578 = vsub.f32 %v1514, %v1376
          %v1579 = vsub.f32 %v1515, %v1372
          %v1580 = vsub.f32 %v1516, %v1376
          %v1581 = vsub.f32 %v1517, %v1372
          %v1582 = vsub.f32 %v1518, %v1376
          %v1583 = vsub.f32 %v1519, %v1372
          %v1584 = vsub.f32 %v1520, %v1376
          %v1585 = vsub.f32 %v1521, %v1380
          %v1586 = vsub.f32 %v1522, %v1384
          %v1587 = vsub.f32 %v1523, %v1380
          %v1588 = vsub.f32 %v1524, %v1384
          %v1589 = vsub.f32 %v1525, %v1380
          %v1590 = vsub.f32 %v1526, %v1384
          %v1591 = vsub.f32 %v1527, %v1380
          %v1592 = vsub.f32 %v1528, %v1384
          %v1593 = vsub.f32 %v1529, %v1388
          %v1594 = vsub.f32 %v1530, %v1392
          %v1595 = vsub.f32 %v1531, %v1388
          %v1596 = vsub.f32 %v1532, %v1392
          %v1597 = vsub.f32 %v1533, %v1388
          %v1598 = vsub.f32 %v1534, %v1392
          %v1599 = vsub.f32 %v1535, %v1388
          %v1600 = vsub.f32 %v1536, %v1392
          %v1601 = vsub.f32 %v1537, %v1396
          %v1602 = vsub.f32 %v1538, %v1400
          %v1603 = vsub.f32 %v1539, %v1396
          %v1604 = vsub.f32 %v1540, %v1400
          %v1605 = vsub.f32 %v1541, %v1396
          %v1606 = vsub.f32 %v1542, %v1400
          %v1607 = vsub.f32 %v1543, %v1396
          %v1608 = vsub.f32 %v1544, %v1400
          %v1609 = vmul.f32 %v1545, %v1208
          %v1610 = vmul.f32 %v1546, %v1212
          %v1611 = vmul.f32 %v1547, %v1208
          %v1612 = vmul.f32 %v1548, %v1212
          %v1613 = vmul.f32 %v1549, %v1208
          %v1614 = vmul.f32 %v1550, %v1212
          %v1615 = vmul.f32 %v1551, %v1208
          %v1616 = vmul.f32 %v1552, %v1212
          %v1617 = vmul.f32 %v1553, %v1216
          %v1618 = vmul.f32 %v1554, %v1220
          %v1619 = vmul.f32 %v1555, %v1216
          %v1620 = vmul.f32 %v1556, %v1220
          %v1621 = vmul.f32 %v1557, %v1216
          %v1622 = vmul.f32 %v1558, %v1220
          %v1623 = vmul.f32 %v1559, %v1216
          %v1624 = vmul.f32 %v1560, %v1220
          %v1625 = vmul.f32 %v1561, %v1224
          %v1626 = vmul.f32 %v1562, %v1228
          %v1627 = vmul.f32 %v1563, %v1224
          %v1628 = vmul.f32 %v1564, %v1228
          %v1629 = vmul.f32 %v1565, %v1224
          %v1630 = vmul.f32 %v1566, %v1228
          %v1631 = vmul.f32 %v1567, %v1224
          %v1632 = vmul.f32 %v1568, %v1228
          %v1633 = vmul.f32 %v1569, %v1232
          %v1634 = vmul.f32 %v1570, %v1236
          %v1635 = vmul.f32 %v1571, %v1232
          %v1636 = vmul.f32 %v1572, %v1236
          %v1637 = vmul.f32 %v1573, %v1232
          %v1638 = vmul.f32 %v1574, %v1236
          %v1639 = vmul.f32 %v1575, %v1232
          %v1640 = vmul.f32 %v1576, %v1236
          %v1641 = vmul.f32 %v1577, %v1240
          %v1642 = vmul.f32 %v1578, %v1244
          %v1643 = vmul.f32 %v1579, %v1240
          %v1644 = vmul.f32 %v1580, %v1244
          %v1645 = vmul.f32 %v1581, %v1240
          %v1646 = vmul.f32 %v1582, %v1244
          %v1647 = vmul.f32 %v1583, %v1240
          %v1648 = vmul.f32 %v1584, %v1244
          %v1649 = vmul.f32 %v1585, %v1248
          %v1650 = vmul.f32 %v1586, %v1252
          %v1651 = vmul.f32 %v1587, %v1248
          %v1652 = vmul.f32 %v1588, %v1252
          %v1653 = vmul.f32 %v1589, %v1248
          %v1654 = vmul.f32 %v1590, %v1252
          %v1655 = vmul.f32 %v1591, %v1248
          %v1656 = vmul.f32 %v1592, %v1252
          %v1657 = vmul.f32 %v1593, %v1256
          %v1658 = vmul.f32 %v1594, %v1260
          %v1659 = vmul.f32 %v1595, %v1256
          %v1660 = vmul.f32 %v1596, %v1260
          %v1661 = vmul.f32 %v1597, %v1256
          %v1662 = vmul.f32 %v1598, %v1260
          %v1663 = vmul.f32 %v1599, %v1256
          %v1664 = vmul.f32 %v1600, %v1260
          %v1665 = vmul.f32 %v1601, %v1264
          %v1666 = vmul.f32 %v1602, %v1268
          %v1667 = vmul.f32 %v1603, %v1264
          %v1668 = vmul.f32 %v1604, %v1268
          %v1669 = vmul.f32 %v1605, %v1264
          %v1670 = vmul.f32 %v1606, %v1268
          %v1671 = vmul.f32 %v1607, %v1264
          %v1672 = vmul.f32 %v1608, %v1268
          %v1673 = vpack.c.bf16 %v1611, %v1609
          %v1674 = vpack.c.bf16 %v1612, %v1610
          %v1675 = vpack.c.bf16 %v1615, %v1613
          %v1676 = vpack.c.bf16 %v1616, %v1614
          %v1677 = vpack.c.bf16 %v1619, %v1617
          %v1678 = vpack.c.bf16 %v1620, %v1618
          %v1679 = vpack.c.bf16 %v1623, %v1621
          %v1680 = vpack.c.bf16 %v1624, %v1622
          %v1681 = vpack.c.bf16 %v1627, %v1625
          %v1682 = vpack.c.bf16 %v1628, %v1626
          %v1683 = vpack.c.bf16 %v1631, %v1629
          %v1684 = vpack.c.bf16 %v1632, %v1630
          %v1685 = vpack.c.bf16 %v1635, %v1633
          %v1686 = vpack.c.bf16 %v1636, %v1634
          %v1687 = vpack.c.bf16 %v1639, %v1637
          %v1688 = vpack.c.bf16 %v1640, %v1638
          %v1689 = vpack.c.bf16 %v1643, %v1641
          %v1690 = vpack.c.bf16 %v1644, %v1642
          %v1691 = vpack.c.bf16 %v1647, %v1645
          %v1692 = vpack.c.bf16 %v1648, %v1646
          %v1693 = vpack.c.bf16 %v1651, %v1649
          %v1694 = vpack.c.bf16 %v1652, %v1650
          %v1695 = vpack.c.bf16 %v1655, %v1653
          %v1696 = vpack.c.bf16 %v1656, %v1654
          %v1697 = vpack.c.bf16 %v1659, %v1657
          %v1698 = vpack.c.bf16 %v1660, %v1658
          %v1699 = vpack.c.bf16 %v1663, %v1661
          %v1700 = vpack.c.bf16 %v1664, %v1662
          %v1701 = vpack.c.bf16 %v1667, %v1665
          %v1702 = vpack.c.bf16 %v1668, %v1666
          %v1703 = vpack.c.bf16 %v1671, %v1669
          %v1704 = vpack.c.bf16 %v1672, %v1670
          %1705 = vst [vmem:[#allocation3] sm:$0xff] %v1673
          %1706 = vst [vmem:[#allocation3 + $0x8] sm:$0xff] %v1674
          %1707 = vst [vmem:[#allocation3 + $0x10] sm:$0xff] %v1675
          %1708 = vst [vmem:[#allocation3 + $0x18] sm:$0xff] %v1676
          %1709 = vst [vmem:[#allocation3 + $0x20] sm:$0xff] %v1677
          %1710 = vst [vmem:[#allocation3 + $0x28] sm:$0xff] %v1678
          %1711 = vst [vmem:[#allocation3 + $0x30] sm:$0xff] %v1679
          %1712 = vst [vmem:[#allocation3 + $0x38] sm:$0xff] %v1680
          %1713 = vst [vmem:[#allocation3 + $0x40] sm:$0xff] %v1681
          %1714 = vst [vmem:[#allocation3 + $0x48] sm:$0xff] %v1682
          %1715 = vst [vmem:[#allocation3 + $0x50] sm:$0xff] %v1683
          %1716 = vst [vmem:[#allocation3 + $0x58] sm:$0xff] %v1684
          %1717 = vst [vmem:[#allocation3 + $0x60] sm:$0xff] %v1685
          %1718 = vst [vmem:[#allocation3 + $0x68] sm:$0xff] %v1686
          %1719 = vst [vmem:[#allocation3 + $0x70] sm:$0xff] %v1687
          %1720 = vst [vmem:[#allocation3 + $0x78] sm:$0xff] %v1688
          %1721 = vst [vmem:[#allocation3 + $0x80] sm:$0xff] %v1689
          %1722 = vst [vmem:[#allocation3 + $0x88] sm:$0xff] %v1690
          %1723 = vst [vmem:[#allocation3 + $0x90] sm:$0xff] %v1691
          %1724 = vst [vmem:[#allocation3 + $0x98] sm:$0xff] %v1692
          %1725 = vst [vmem:[#allocation3 + $0xa0] sm:$0xff] %v1693
          %1726 = vst [vmem:[#allocation3 + $0xa8] sm:$0xff] %v1694
          %1727 = vst [vmem:[#allocation3 + $0xb0] sm:$0xff] %v1695
          %1728 = vst [vmem:[#allocation3 + $0xb8] sm:$0xff] %v1696
          %1729 = vst [vmem:[#allocation3 + $0xc0] sm:$0xff] %v1697
          %1730 = vst [vmem:[#allocation3 + $0xc8] sm:$0xff] %v1698
          %1731 = vst [vmem:[#allocation3 + $0xd0] sm:$0xff] %v1699
          %1732 = vst [vmem:[#allocation3 + $0xd8] sm:$0xff] %v1700
          %1733 = vst [vmem:[#allocation3 + $0xe0] sm:$0xff] %v1701
          %1734 = vst [vmem:[#allocation3 + $0xe8] sm:$0xff] %v1702
          %1735 = vst [vmem:[#allocation3 + $0xf0] sm:$0xff] %v1703
          %1736 = vst [vmem:[#allocation3 + $0xf8] sm:$0xff] %v1704
        $region80: #{tpu_custom_call.1} parent=47 // pred_fallthru
          _
        %v1737 = vld [vmem:[#allocation4] sm:$0xff]
        %v1738 = vld [vmem:[#allocation4 + $0x8] sm:$0xff]
        %v1739 = vld [vmem:[#allocation4 + $0x10] sm:$0xff]
        %v1740 = vld [vmem:[#allocation4 + $0x18] sm:$0xff]
        %v1741 = vpack.c.bf16 %v1739, %v1737
        %v1742 = vpack.c.bf16 %v1740, %v1738
        %v1743 = vld [vmem:[#allocation2] sm:$0xff]
        %v1744 = vld [vmem:[#allocation2 + $0x8] sm:$0xff]
        %v1745 = vld [vmem:[#allocation2 + $0x10] sm:$0xff]
        %v1746 = vld [vmem:[#allocation2 + $0x18] sm:$0xff]
        %v1747 = vld [vmem:[#allocation2 + $0x20] sm:$0xff]
        %v1748 = vld [vmem:[#allocation2 + $0x28] sm:$0xff]
        %v1749 = vld [vmem:[#allocation2 + $0x30] sm:$0xff]
        %v1750 = vld [vmem:[#allocation2 + $0x38] sm:$0xff]
        %v1751 = vld [vmem:[#allocation2 + $0x40] sm:$0xff]
        %v1752 = vld [vmem:[#allocation2 + $0x48] sm:$0xff]
        %v1753 = vld [vmem:[#allocation2 + $0x50] sm:$0xff]
        %v1754 = vld [vmem:[#allocation2 + $0x58] sm:$0xff]
        %v1755 = vld [vmem:[#allocation2 + $0x60] sm:$0xff]
        %v1756 = vld [vmem:[#allocation2 + $0x68] sm:$0xff]
        %v1757 = vld [vmem:[#allocation2 + $0x70] sm:$0xff]
        %v1758 = vld [vmem:[#allocation2 + $0x78] sm:$0xff]
        %v1759 = vld [vmem:[#allocation2 + $0x80] sm:$0xff]
        %v1760 = vld [vmem:[#allocation2 + $0x88] sm:$0xff]
        %v1761 = vld [vmem:[#allocation2 + $0x90] sm:$0xff]
        %v1762 = vld [vmem:[#allocation2 + $0x98] sm:$0xff]
        %v1763 = vld [vmem:[#allocation2 + $0xa0] sm:$0xff]
        %v1764 = vld [vmem:[#allocation2 + $0xa8] sm:$0xff]
        %v1765 = vld [vmem:[#allocation2 + $0xb0] sm:$0xff]
        %v1766 = vld [vmem:[#allocation2 + $0xb8] sm:$0xff]
        %v1767 = vld [vmem:[#allocation2 + $0xc0] sm:$0xff]
        %v1768 = vld [vmem:[#allocation2 + $0xc8] sm:$0xff]
        %v1769 = vld [vmem:[#allocation2 + $0xd0] sm:$0xff]
        %v1770 = vld [vmem:[#allocation2 + $0xd8] sm:$0xff]
        %v1771 = vld [vmem:[#allocation2 + $0xe0] sm:$0xff]
        %v1772 = vld [vmem:[#allocation2 + $0xe8] sm:$0xff]
        %v1773 = vld [vmem:[#allocation2 + $0xf0] sm:$0xff]
        %v1774 = vld [vmem:[#allocation2 + $0xf8] sm:$0xff]
        %1775 = vmatprep.subr.bf16.mxu0 %v1744
        %1776 = vmatpush1.bf16.xpose.msra.mxu0 %v1743
        %1777 = vmatprep.subr.bf16.mxu0 %v1746
        %1778 = vmatpush1.bf16.xpose.msra.mxu0 %v1745
        %1779 = vmatprep.subr.bf16.mxu0 %v1748
        %1780 = vmatpush1.bf16.xpose.msra.mxu0 %v1747
        %1781 = vmatprep.subr.bf16.mxu0 %v1750
        %1782 = vmatpush1.bf16.xpose.msra.mxu0 %v1749
        %1783 = vmatprep.subr.bf16.mxu0 %v1752
        %1784 = vmatpush1.bf16.xpose.msra.mxu0 %v1751
        %1785 = vmatprep.subr.bf16.mxu0 %v1754
        %1786 = vmatpush1.bf16.xpose.msra.mxu0 %v1753
        %1787 = vmatprep.subr.bf16.mxu0 %v1756
        %1788 = vmatpush1.bf16.xpose.msra.mxu0 %v1755
        %1789 = vmatprep.subr.bf16.mxu0 %v1758
        %1790 = vmatpush1.bf16.xpose.msra.mxu0 %v1757
        %1791 = vmatprep.subr.bf16.mxu0 %v1760
        %1792 = vmatpush1.bf16.xpose.msra.mxu0 %v1759
        %1793 = vmatprep.subr.bf16.mxu0 %v1762
        %1794 = vmatpush1.bf16.xpose.msra.mxu0 %v1761
        %1795 = vmatprep.subr.bf16.mxu0 %v1764
        %1796 = vmatpush1.bf16.xpose.msra.mxu0 %v1763
        %1797 = vmatprep.subr.bf16.mxu0 %v1766
        %1798 = vmatpush1.bf16.xpose.msra.mxu0 %v1765
        %1799 = vmatprep.subr.bf16.mxu0 %v1768
        %1800 = vmatpush1.bf16.xpose.msra.mxu0 %v1767
        %1801 = vmatprep.subr.bf16.mxu0 %v1770
        %1802 = vmatpush1.bf16.xpose.msra.mxu0 %v1769
        %1803 = vmatprep.subr.bf16.mxu0 %v1772
        %1804 = vmatpush1.bf16.xpose.msra.mxu0 %v1771
        %1805 = vmatprep.subr.bf16.mxu0 %v1774
        %1806 = vmatpush1.bf16.xpose.msra.mxu0 %v1773
        %1807 = vmatprep.mubr.bf16.mxu0 %v1742
        %1808 = vmatmul.mubr.bf16.gmra.mrb[0].mxu0 %v1741
        %v1809 = vpop.f32.mrb[0].mxu0
        %v1810 = vadd.f32 0.0, %v1809
        %v1811 = vpop.f32.mrb[0].mxu0
        %v1812 = vadd.f32 0.0, %v1811
        %v1813 = vpop.f32.mrb[0].mxu0
        %v1814 = vadd.f32 0.0, %v1813
        %v1815 = vpop.f32.mrb[0].mxu0
        %v1816 = vadd.f32 0.0, %v1815
        %1817 = vdwg.mxu0
        %v1818 = vld [vmem:[#allocation3] sm:$0xff]
        %v1819 = vld [vmem:[#allocation3 + $0x8] sm:$0xff]
        %v1820 = vld [vmem:[#allocation3 + $0x10] sm:$0xff]
        %v1821 = vld [vmem:[#allocation3 + $0x18] sm:$0xff]
        %v1822 = vld [vmem:[#allocation3 + $0x20] sm:$0xff]
        %v1823 = vld [vmem:[#allocation3 + $0x28] sm:$0xff]
        %v1824 = vld [vmem:[#allocation3 + $0x30] sm:$0xff]
        %v1825 = vld [vmem:[#allocation3 + $0x38] sm:$0xff]
        %v1826 = vld [vmem:[#allocation3 + $0x40] sm:$0xff]
        %v1827 = vld [vmem:[#allocation3 + $0x48] sm:$0xff]
        %v1828 = vld [vmem:[#allocation3 + $0x50] sm:$0xff]
        %v1829 = vld [vmem:[#allocation3 + $0x58] sm:$0xff]
        %v1830 = vld [vmem:[#allocation3 + $0x60] sm:$0xff]
        %v1831 = vld [vmem:[#allocation3 + $0x68] sm:$0xff]
        %v1832 = vld [vmem:[#allocation3 + $0x70] sm:$0xff]
        %v1833 = vld [vmem:[#allocation3 + $0x78] sm:$0xff]
        %v1834 = vld [vmem:[#allocation3 + $0x80] sm:$0xff]
        %v1835 = vld [vmem:[#allocation3 + $0x88] sm:$0xff]
        %v1836 = vld [vmem:[#allocation3 + $0x90] sm:$0xff]
        %v1837 = vld [vmem:[#allocation3 + $0x98] sm:$0xff]
        %v1838 = vld [vmem:[#allocation3 + $0xa0] sm:$0xff]
        %v1839 = vld [vmem:[#allocation3 + $0xa8] sm:$0xff]
        %v1840 = vld [vmem:[#allocation3 + $0xb0] sm:$0xff]
        %v1841 = vld [vmem:[#allocation3 + $0xb8] sm:$0xff]
        %v1842 = vld [vmem:[#allocation3 + $0xc0] sm:$0xff]
        %v1843 = vld [vmem:[#allocation3 + $0xc8] sm:$0xff]
        %v1844 = vld [vmem:[#allocation3 + $0xd0] sm:$0xff]
        %v1845 = vld [vmem:[#allocation3 + $0xd8] sm:$0xff]
        %v1846 = vld [vmem:[#allocation3 + $0xe0] sm:$0xff]
        %v1847 = vld [vmem:[#allocation3 + $0xe8] sm:$0xff]
        %v1848 = vld [vmem:[#allocation3 + $0xf0] sm:$0xff]
        %v1849 = vld [vmem:[#allocation3 + $0xf8] sm:$0xff]
        %1850 = vmatprep.subr.bf16.mxu0 %v1819
        %1851 = vmatpush1.bf16.xpose.msra.mxu0 %v1818
        %1852 = vmatprep.subr.bf16.mxu0 %v1821
        %1853 = vmatpush1.bf16.xpose.msra.mxu0 %v1820
        %1854 = vmatprep.subr.bf16.mxu0 %v1823
        %1855 = vmatpush1.bf16.xpose.msra.mxu0 %v1822
        %1856 = vmatprep.subr.bf16.mxu0 %v1825
        %1857 = vmatpush1.bf16.xpose.msra.mxu0 %v1824
        %1858 = vmatprep.subr.bf16.mxu0 %v1827
        %1859 = vmatpush1.bf16.xpose.msra.mxu0 %v1826
        %1860 = vmatprep.subr.bf16.mxu0 %v1829
        %1861 = vmatpush1.bf16.xpose.msra.mxu0 %v1828
        %1862 = vmatprep.subr.bf16.mxu0 %v1831
        %1863 = vmatpush1.bf16.xpose.msra.mxu0 %v1830
        %1864 = vmatprep.subr.bf16.mxu0 %v1833
        %1865 = vmatpush1.bf16.xpose.msra.mxu0 %v1832
        %1866 = vmatprep.subr.bf16.mxu0 %v1835
        %1867 = vmatpush1.bf16.xpose.msra.mxu0 %v1834
        %1868 = vmatprep.subr.bf16.mxu0 %v1837
        %1869 = vmatpush1.bf16.xpose.msra.mxu0 %v1836
        %1870 = vmatprep.subr.bf16.mxu0 %v1839
        %1871 = vmatpush1.bf16.xpose.msra.mxu0 %v1838
        %1872 = vmatprep.subr.bf16.mxu0 %v1841
        %1873 = vmatpush1.bf16.xpose.msra.mxu0 %v1840
        %1874 = vmatprep.subr.bf16.mxu0 %v1843
        %1875 = vmatpush1.bf16.xpose.msra.mxu0 %v1842
        %1876 = vmatprep.subr.bf16.mxu0 %v1845
        %1877 = vmatpush1.bf16.xpose.msra.mxu0 %v1844
        %1878 = vmatprep.subr.bf16.mxu0 %v1847
        %1879 = vmatpush1.bf16.xpose.msra.mxu0 %v1846
        %1880 = vmatprep.subr.bf16.mxu0 %v1849
        %1881 = vmatpush1.bf16.xpose.msra.mxu0 %v1848
        %1882 = vmatprep.mubr.bf16.mxu0 %v1742
        %1883 = vmatmul.mubr.bf16.gmra.mrb[0].mxu0 %v1741
        %v1884 = vpop.f32.mrb[0].mxu0
        %v1885 = vadd.f32 0.0, %v1884
        %v1886 = vpop.f32.mrb[0].mxu0
        %v1887 = vadd.f32 0.0, %v1886
        %v1888 = vpop.f32.mrb[0].mxu0
        %v1889 = vadd.f32 0.0, %v1888
        %v1890 = vpop.f32.mrb[0].mxu0
        %v1891 = vadd.f32 0.0, %v1890
        %1892 = vdwg.mxu0
        %v1893 = vxor.u32 %v1810, 2147483648
        %v1894 = vxor.u32 %v1812, 2147483648
        %v1895 = vxor.u32 %v1814, 2147483648
        %v1896 = vxor.u32 %v1816, 2147483648
        %v1897 = vmul.f32 %v1893, 1.442695
        %v1898 = vpow.pop %v1897
        %v1899 = vmul.f32 %v1894, 1.442695
        %v1900 = vpow.pop %v1899
        %v1901 = vmul.f32 %v1895, 1.442695
        %v1902 = vpow.pop %v1901
        %v1903 = vmul.f32 %v1896, 1.442695
        %v1904 = vpow.pop %v1903
        %v1905 = vadd.f32 %v1898, 1.0
        %v1906 = vadd.f32 %v1900, 1.0
        %v1907 = vadd.f32 %v1902, 1.0
        %v1908 = vadd.f32 %v1904, 1.0
        %v1909 = vrcp.pop %v1905
        %v1910 = vmul.f32 1.0, %v1909
        %v1911 = vrcp.pop %v1906
        %v1912 = vmul.f32 1.0, %v1911
        %v1913 = vrcp.pop %v1907
        %v1914 = vmul.f32 1.0, %v1913
        %v1915 = vrcp.pop %v1908
        %v1916 = vmul.f32 1.0, %v1915
        %v1917 = vmul.f32 %v1810, %v1910
        %v1918 = vmul.f32 %v1812, %v1912
        %v1919 = vmul.f32 %v1814, %v1914
        %v1920 = vmul.f32 %v1816, %v1916
        %v1921 = vmul.f32 %v1917, %v1885
        %v1922 = vmul.f32 %v1918, %v1887
        %v1923 = vmul.f32 %v1919, %v1889
        %v1924 = vmul.f32 %v1920, %v1891
        %v1925 = vpack.c.bf16 %v1923, %v1921
        %v1926 = vpack.c.bf16 %v1924, %v1922
        %v1929 = vunpack.c.l.b16 %v1925
        %v1930 = vunpack.c.l.b16 %v1926
        %v1931 = vunpack.c.h.b16 %v1925
        %v1932 = vunpack.c.h.b16 %v1926
        %v1933 = vpack.c.b16 %v1930, %v1929
        %v1934 = vpack.c.b16 %v1932, %v1931
        %1937 = vst [vmem:[%s519] sm:$0xff] %v1933
        %1938 = vst [vmem:[%s519 + $0x8] sm:$0xff] %v1934
        %s1939 = sand.u32 %s235, 1
        %s1940 = scalar_lea.sflag [#allocation6], %s1939
        %s1941 = sand.u32 %s235, 1
        %s1942 = smul.addr %s1941, 16
        %s1943 = scalar_lea.vmem [#allocation16], %s1942
        // Predicated region
        $region81: #{tpu_custom_call.1} parent=47 // pred_check
          %p1944 = pneg %p245
        $region82: #{tpu_custom_call.1} parent=47 // pred_check_branch
          %1946 = sbr.rel (%p1944) target = $region84
        $region83: #{tpu_custom_call.1} parent=47 // pred_region
          %s1947 = smul.u32 2, %s36
          %s1948 = smul.u32 2, %s35
          %s1950 = ssub.s32 256, 256
          %1951 = vsyncadd %s1940, %s1950
          %s1952 = smul.addr %s1947, 4
          %s1953 = sadd.s32 %s1948, %s1952
          %s1954 = smul.addr %s1953, 64
          %s1955 = scalar_lea.hbm %s7, %s1954
          %s1956 = sshll.u32 %s1943, 4
          %s1957 = int_to_ptr.vmem [resolvable:$true] %s1956
          %1962 = dma.vmem_to_hbm [thread:$0]  %s1957, 256, %s1955, %s1940, 128, 256, 8
        $region84: #{tpu_custom_call.1} parent=47 // pred_fallthru
          _
      $region48: #{tpu_custom_call.1} parent=5 // pred_fallthru
        _
      %p1963 = scmp.le.s32.totalorder 2, %s26
      // Predicated region
      $region85: #{tpu_custom_call.1} parent=5 // pred_check
        %p1964 = pneg %p1963
      $region86: #{tpu_custom_call.1} parent=5 // pred_check_branch
        %1966 = sbr.rel (%p1964) target = $region88
      $region87: #{tpu_custom_call.1} parent=5 // pred_region
        %s1967 = ssub.s32 %s26, 2
        // Predicated region
        $region89: #{tpu_custom_call.1} parent=87 // pred_check
          %p1968 = pneg %p251
        $region90: #{tpu_custom_call.1} parent=87 // pred_check_branch
          %1970 = sbr.rel (%p1968) target = $region92
        $region91: #{tpu_custom_call.1} parent=87 // pred_region
          %s1971 = sand.u32 %s236, 1
          %s1972 = scalar_lea.sflag [#allocation6], %s1971
          %s1973 = sand.u32 %s236, 1
          %s1974 = smul.addr %s1973, 16
          %s1975 = scalar_lea.vmem [#allocation16], %s1974
          %1976 = dma.done %s1972, 256
        $region92: #{tpu_custom_call.1} parent=87 // pred_fallthru
          _
      $region88: #{tpu_custom_call.1} parent=5 // pred_fallthru
        _
    $region6: #{tpu_custom_call.1} parent=1 // loop_footer
      %s30 = sadd.s32 1, %s26
    $region7: #{tpu_custom_call.1} parent=1 // loop_footer_branch
      %25 = sbr.rel target = $region3
    $region8: #{tpu_custom_call.1} parent=1 // loop_exit
      _
    %1977 = vsyncpa [#allocation5], 1
    %s1978 = scalar_lea.sflag [#allocation5], 1
    %1979 = vsyncpa %s1978, 1
    %1980 = vsyncpa [#allocation8], 1
    %s1981 = scalar_lea.sflag [#allocation8], 1
    %1982 = vsyncpa %s1981, 1
    %1983 = vsyncpa [#allocation11], 1
    %s1984 = scalar_lea.sflag [#allocation11], 1
    %1985 = vsyncpa %s1984, 1
    %1986 = vsyncpa [#allocation14], 1
    %s1987 = scalar_lea.sflag [#allocation14], 1
    %1988 = vsyncpa %s1987, 1
    %1989 = vsyncpa [#allocation6], 1
    %s1990 = scalar_lea.sflag [#allocation6], 1
    %1991 = vsyncpa %s1990, 1

</llo_original>
